<compile_context>
chip_gen: v5e
topology: v5e:2x2
jax: 0.10.0
libtpu: 0.0.40
codegen_flags: <defaults>
</compile_context>

<pallas_src>
import functools

import jax
import jax.numpy as jnp
from jax import lax
from jax.experimental import pallas as pl
from jax.experimental.pallas import tpu as pltpu

BN_EPS = 1e-5
_NEG_LARGE = -3.0e38   # representable in f32; used to mask padded lanes for max


def _roll_lanes(x, d):
    """rolled[..., p] = x[..., (p + d) % n] for static d (XLU lane rotation)."""
    if d == 0:
        return x
    n = x.shape[-1]
    return pltpu.roll(x, (-d) % n, axis=x.ndim - 1)


# ------------------------------ Fused kernel ---------------------------------
def _cbam_kernel(x_ref, w1t_ref, b1_ref, w2t_ref, b2_ref, convw_ref, bn_ref,
                 o_ref, *, W, HW):
    f32 = jnp.float32
    Bt, C, HWp = x_ref.shape
    padded = HWp != HW

    pos = lax.broadcasted_iota(jnp.int32, (1, HWp), 1)    # flat lane position
    col = pos % W                                         # image column per lane

    # ---------------- Channel gate -------------------------------------------
    # Global avg / max pooling over the (possibly lane-padded) spatial axis.
    if padded:
        lane_ok3 = (pos < HW)[:, None, :]                 # (1, 1, HWp)
        xv = x_ref[...].astype(f32)
        ssum = jnp.sum(xv, axis=2)                        # zero padding is fine
        smax = jnp.max(jnp.where(lane_ok3, xv, _NEG_LARGE), axis=2)
    else:
        ssum = jnp.sum(x_ref[...].astype(f32), axis=2)
        smax = jnp.max(x_ref[...].astype(f32), axis=2)
    avg = ssum * (1.0 / HW)                               # (Bt, C)

    # Shared MLP on all 2*Bt pooled rows at once (C -> C/r -> C, ReLU, biases).
    pooled = jnp.concatenate([avg, smax], axis=0)         # (2*Bt, C)
    h = jnp.dot(pooled, w1t_ref[...], preferred_element_type=f32)
    h = jnp.maximum(h + b1_ref[...], 0.0)                 # (2*Bt, Cr)
    a2 = jnp.dot(h, w2t_ref[...], preferred_element_type=f32) + b2_ref[...]
    ch_scale = jax.nn.sigmoid(a2[:Bt] + a2[Bt:])          # mlp(avg)+mlp(max), (Bt, C)

    # ---------------- Spatial gate --------------------------------------------
    # Channel-max / channel-mean of (x * ch_scale), computed in 8-channel chunks
    # read straight from the input ref so the gated (Bt, C, HWp) tensor is
    # never materialized (review item 1).
    CH = min(C, 8)
    cmax = None
    csum = None
    for c0 in range(0, C, CH):
        c1 = min(c0 + CH, C)
        xs = x_ref[:, c0:c1, :].astype(f32) * ch_scale[:, c0:c1][:, :, None]
        m = jnp.max(xs, axis=1)
        s = jnp.sum(xs, axis=1)
        cmax = m if cmax is None else jnp.maximum(cmax, m)
        csum = s if csum is None else csum + s
    maps = (cmax, csum * (1.0 / C))           # order matches torch.cat((max, mean))

    # 14 column-shifted + column-masked pooled maps, reused by all 49 taps.
    colshift = []
    for c in range(2):
        per_c = []
        for j in range(7):
            dj = j - 3
            s = _roll_lanes(maps[c], dj)
            if dj != 0:
                cj = col + dj
                s = jnp.where(jnp.logical_and(cj >= 0, cj < W), s, 0.0)
            per_c.append(s)
        colshift.append(per_c)

    # conv[p] = sum_i rowshift_{i-3}( sum_{c,j} K[c,i,j] * colshift[c][j] )[p].
    # The flat-position mask reproduces the top/bottom zero padding of the 7x7
    # conv (and keeps lane-padding garbage out of valid outputs); the column
    # mask above reproduces the left/right zero padding.
    conv = None
    for i in range(7):
        inner = None
        for c in range(2):
            for j in range(7):
                term = convw_ref[c * 49 + i * 7 + j] * colshift[c][j]
                inner = term if inner is None else inner + term
        d = (i - 3) * W
        shifted = _roll_lanes(inner, d)
        if d != 0:
            src = pos + d
            shifted = jnp.where(jnp.logical_and(src >= 0, src < HW), shifted, 0.0)
        conv = shifted if conv is None else conv + shifted

    sp_att = jax.nn.sigmoid(conv * bn_ref[0] + bn_ref[1])  # eval-mode BN + sigmoid

    # ---------------- Fused store (no materialized intermediate) -------------
    o_ref[...] = (x_ref[...].astype(f32)
                  * ch_scale[:, :, None]
                  * sp_att[:, None, :]).astype(o_ref.dtype)


# ------------------------------- Wrapper -------------------------------------
def _pick_block_batch(B, bytes_per_sample, target_bytes=4 << 20):
    """Largest divisor of B whose block fits target_bytes, preferring an even
    number of grid steps (balanced v7x megacore sharding) and >= 2 steps."""
    divisors = [d for d in range(1, B + 1) if B % d == 0]
    fits = [d for d in divisors if d * bytes_per_sample <= target_bytes] or [1]
    even_steps = [d for d in fits if (B // d) % 2 == 0]
    if even_steps:
        return max(even_steps)
    multi_steps = [d for d in fits if (B // d) >= 2]
    if multi_steps:
        return max(multi_steps)
    # TODO(synk): B == 1 leaves a single grid step (one idle TensorCore on v7x);
    # a second parallel grid axis over channel chunks would fix that.
    return max(fits)


def _vmem_limit_bytes(block_bytes):
    cap = 64 << 20                      # assume the smallest per-core VMEM (v7x)
    try:
        cap = int(pltpu.get_tpu_info().vmem_capacity_bytes)
    except Exception:
        pass
    # 2x double-buffered input + 2x double-buffered output + ~1 block of
    # transients + fixed headroom; never ask for more than ~7/8 of VMEM.
    need = 5 * block_bytes + (8 << 20)
    return int(max(32 << 20, min(need, cap * 7 // 8)))


def cbam_forward(x, params):
    B, C, H, W = x.shape
    HW = H * W
    HWp = ((HW + 127) // 128) * 128     # lane-dense stores for any H, W
    dtype = x.dtype

    x3 = x.reshape(B, C, HW)            # free row-major reshape
    if HWp != HW:
        # zero pad (sums unaffected; max path is masked to -inf in-kernel)
        x3 = jnp.pad(x3, ((0, 0), (0, 0), (0, HWp - HW)))

    w1t, b1r = params["w1t"], params["b1r"]
    w2t, b2r = params["w2t"], params["b2r"]
    Cr = w1t.shape[1]

    bytes_per_sample = C * HWp * x3.dtype.itemsize
    bt = _pick_block_batch(B, bytes_per_sample)
    block_bytes = bt * bytes_per_sample

    kernel = functools.partial(_cbam_kernel, W=W, HW=HW)
    y3 = pl.pallas_call(
        kernel,
        out_shape=jax.ShapeDtypeStruct((B, C, HWp), dtype),
        grid=(B // bt,),
        in_specs=[
            pl.BlockSpec((bt, C, HWp), lambda b: (b, 0, 0)),
            pl.BlockSpec((C, Cr), lambda b: (0, 0)),
            pl.BlockSpec((1, Cr), lambda b: (0, 0)),
            pl.BlockSpec((Cr, C), lambda b: (0, 0)),
            pl.BlockSpec((1, C), lambda b: (0, 0)),
            pl.BlockSpec(memory_space=pltpu.MemorySpace.SMEM),   # conv weights (98,)
            pl.BlockSpec(memory_space=pltpu.MemorySpace.SMEM),   # BN eff scale/bias (2,)
        ],
        out_specs=pl.BlockSpec((bt, C, HWp), lambda b: (b, 0, 0)),
        compiler_params=pltpu.CompilerParams(
            dimension_semantics=("parallel",),
            vmem_limit_bytes=_vmem_limit_bytes(block_bytes),
        ),
    )(x3, w1t, b1r, w2t, b2r, params["conv_w_flat"], params["bn_eff"])

    if HWp != HW:
        y3 = y3[:, :, :HW]
    return y3.reshape(B, C, H, W)


# --------------------------- Pure-JAX reference ------------------------------
def cbam_ref(x, params):
    avg = x.mean(axis=(2, 3))                        # (B, C)
    mx = x.max(axis=(2, 3))                          # (B, C)

    def mlp(p):
        h = jax.nn.relu(p @ params["w1"].T + params["b1"][None, :])
        return h @ params["w2"].T + params["b2"][None, :]

    scale = jax.nn.sigmoid(mlp(avg) + mlp(mx))[:, :, None, None]
    y = x * scale

    cmax = y.max(axis=1, keepdims=True)
    cmean = y.mean(axis=1, keepdims=True)
    comp = jnp.concatenate([cmax, cmean], axis=1)    # (B, 2, H, W)
    conv = lax.conv_general_dilated(
        comp, params["conv_w"], window_strides=(1, 1),
        padding=[(3, 3), (3, 3)], dimension_numbers=("NCHW", "OIHW", "NCHW"))
    gamma, beta, mean, var = params["bn_raw"]
    bn = (conv - mean) * gamma / jnp.sqrt(var + BN_EPS) + beta
    att = jax.nn.sigmoid(bn)
    return y * att


# ------------------------------ Param init -----------------------------------
def make_params(key, C, reduction_ratio=16):
    Cr = max(C // reduction_ratio, 1)
    k1, k2, k3, k4, k5 = jax.random.split(key, 5)
    w1 = jax.random.normal(k1, (Cr, C), jnp.float32) * 0.1      # Linear C -> C/r
    b1 = jax.random.normal(k2, (Cr,), jnp.float32) * 0.1
    w2 = jax.random.normal(k3, (C, Cr), jnp.float32) * 0.1      # Linear C/r -> C
    b2 = jax.random.normal(k4, (C,), jnp.float32) * 0.1
    conv_w = jax.random.normal(k5, (1, 2, 7, 7), jnp.float32) * 0.1   # 7x7, no bias
    gamma, beta = jnp.float32(1.0), jnp.float32(0.0)             # BN affine defaults
    mean, var = jnp.float32(0.0), jnp.float32(1.0)               # BN running stats
    eff_scale = gamma / jnp.sqrt(var + BN_EPS)
    eff_bias = beta - mean * eff_scale
    return {
        # raw params (pure-JAX reference)
        "w1": w1, "b1": b1, "w2": w2, "b2": b2, "conv_w": conv_w,
        "bn_raw": (gamma, beta, mean, var),
        # kernel-ready params, precomputed once (no per-call transposes)
        "w1t": w1.T, "b1r": b1.reshape(1, -1),
        "w2t": w2.T, "b2r": b2.reshape(1, -1),
        "conv_w_flat": conv_w.reshape(-1),                       # (98,) for SMEM
        "bn_eff": jnp.stack([eff_scale, eff_bias]),              # (2,) for SMEM
    }


if __name__ == "__main__":
    key = jax.random.PRNGKey(0)
    kx, kp, kx2 = jax.random.split(key, 3)

    # Case 1: lane-dense spatial size (16*16 = 256, a multiple of 128).
    B, C, H, W = 2, 32, 16, 16
    params = make_params(kp, C, reduction_ratio=16)
    x = jax.random.normal(kx, (B, C, H, W), jnp.float32)
    out = jax.block_until_ready(cbam_forward(x, params))
    ref = jax.block_until_ready(cbam_ref(x, params))
    assert out.shape == (B, C, H, W)
    err = float(jnp.max(jnp.abs(out - ref)))
    assert err < 1e-4, err

    # Case 2: H*W not a multiple of 128 (12*12 = 144 -> padded to 256 lanes)
    # and a batch that tiles into bt=2 blocks over an even grid.
    B2, H2, W2 = 4, 12, 12
    x2 = jax.random.normal(kx2, (B2, C, H2, W2), jnp.float32)
    out2 = jax.block_until_ready(cbam_forward(x2, params))
    ref2 = jax.block_until_ready(cbam_ref(x2, params))
    assert out2.shape == (B2, C, H2, W2)
    err2 = float(jnp.max(jnp.abs(out2 - ref2)))
    assert err2 < 1e-4, err2

    print("KERNEL_OK")
</pallas_src>

<mosaic_0001>
module attributes {stable_mosaic.version = 11 : i64} {
  func.func @_cbam_kernel(%arg0: i32, %arg1: memref<1x32x256xf32, #tpu.memory_space<vmem>>, %arg2: memref<32x2xf32, #tpu.memory_space<vmem>>, %arg3: memref<1x2xf32, #tpu.memory_space<vmem>>, %arg4: memref<2x32xf32, #tpu.memory_space<vmem>>, %arg5: memref<1x32xf32, #tpu.memory_space<vmem>>, %arg6: memref<98xf32, #tpu.memory_space<smem>>, %arg7: memref<2xf32, #tpu.memory_space<smem>>, %arg8: memref<1x32x256xf32, #tpu.memory_space<vmem>>) attributes {dimension_semantics = [#tpu.dimension_semantics<parallel>], iteration_bounds = array<i64: 2>, scalar_prefetch = 0 : i64, scratch_operands = 0 : i64, tpu.core_type = #tpu.core_type<tc>, window_params = [{transform_indices = @transform_0, window_bounds = array<i64: 1, 32, 256>}, {pipeline_mode = #tpu.pipeline_mode<synchronous>, transform_indices = @transform_1, window_bounds = array<i64: 32, 2>}, {pipeline_mode = #tpu.pipeline_mode<synchronous>, transform_indices = @transform_2, window_bounds = array<i64: 1, 2>}, {pipeline_mode = #tpu.pipeline_mode<synchronous>, transform_indices = @transform_3, window_bounds = array<i64: 2, 32>}, {pipeline_mode = #tpu.pipeline_mode<synchronous>, transform_indices = @transform_4, window_bounds = array<i64: 1, 32>}, {transform_indices = @transform_5, window_bounds = array<i64: 98>}, {transform_indices = @transform_6, window_bounds = array<i64: 2>}, {transform_indices = @transform_7, window_bounds = array<i64: 1, 32, 256>}]} {
    %0 = tpu.iota {dimensions = array<i32: 1>} : vector<1x256xi32>
    %c16_i32 = arith.constant 16 : i32
    %c0_i32 = arith.constant 0 : i32
    %1 = arith.cmpi eq, %c16_i32, %c0_i32 : i32
    %c1_i32 = arith.constant 1 : i32
    %2 = arith.select %1, %c1_i32, %c16_i32 : i32
    %3 = vector.broadcast %2 : i32 to vector<1x256xi32>
    %4 = arith.remsi %0, %3 : vector<1x256xi32>
    %c0_i32_0 = arith.constant 0 : i32
    %5 = vector.broadcast %c0_i32_0 : i32 to vector<1x256xi32>
    %6 = arith.cmpi ne, %4, %5 : vector<1x256xi32>
    %c0_i32_1 = arith.constant 0 : i32
    %7 = vector.broadcast %c0_i32_1 : i32 to vector<1x256xi32>
    %8 = arith.cmpi slt, %4, %7 : vector<1x256xi32>
    %c0_i32_2 = arith.constant 0 : i32
    %9 = arith.cmpi slt, %2, %c0_i32_2 : i32
    %10 = vector.broadcast %9 : i1 to vector<1x256xi1>
    %11 = vector.broadcast %10 : vector<1x256xi1> to vector<1x256xi1>
    %12 = arith.xori %8, %11 : vector<1x256xi1>
    %13 = arith.andi %12, %6 : vector<1x256xi1>
    %14 = vector.broadcast %2 : i32 to vector<1x256xi32>
    %15 = arith.addi %4, %14 : vector<1x256xi32>
    %16 = arith.select %13, %15, %4 : vector<1x256xi1>, vector<1x256xi32>
    %c0 = arith.constant 0 : index
    %c0_3 = arith.constant 0 : index
    %c0_4 = arith.constant 0 : index
    %17 = vector.load %arg1[%c0, %c0_3, %c0_4] : memref<1x32x256xf32, #tpu.memory_space<vmem>>, vector<1x32x256xf32>
    %cst = arith.constant dense<0.000000e+00> : vector<1x32xf32>
    %18 = vector.multi_reduction <add>, %17, %cst [2] : vector<1x32x256xf32> to vector<1x32xf32>
    %c0_5 = arith.constant 0 : index
    %c0_6 = arith.constant 0 : index
    %c0_7 = arith.constant 0 : index
    %19 = vector.load %arg1[%c0_5, %c0_6, %c0_7] : memref<1x32x256xf32, #tpu.memory_space<vmem>>, vector<1x32x256xf32>
    %cst_8 = arith.constant dense<0xFF800000> : vector<1x32xf32>
    %20 = vector.multi_reduction <maximumf>, %19, %cst_8 [2] : vector<1x32x256xf32> to vector<1x32xf32>
    %cst_9 = arith.constant 3.906250e-03 : f32
    %21 = vector.broadcast %cst_9 : f32 to vector<1x32xf32>
    %22 = arith.mulf %18, %21 : vector<1x32xf32>
    %23 = tpu.concatenate %22, %20 in 0 : vector<1x32xf32>, vector<1x32xf32> -> vector<2x32xf32>
    %c0_10 = arith.constant 0 : index
    %c0_11 = arith.constant 0 : index
    %24 = vector.load %arg2[%c0_10, %c0_11] : memref<32x2xf32, #tpu.memory_space<vmem>>, vector<32x2xf32>
    %cst_12 = arith.constant dense<0.000000e+00> : vector<2x2xf32>
    %25 = tpu.matmul %23, %24, %cst_12 {dimension_numbers = #tpu.dot_dimension_numbers<[1], [0], [0], [1], [0, 0, 1, 1], [], []>} : vector<2x32xf32>, vector<32x2xf32>, vector<2x2xf32> -> vector<2x2xf32>
    %c0_13 = arith.constant 0 : index
    %c0_14 = arith.constant 0 : index
    %26 = vector.load %arg3[%c0_13, %c0_14] : memref<1x2xf32, #tpu.memory_space<vmem>>, vector<1x2xf32>
    %27 = vector.broadcast %26 : vector<1x2xf32> to vector<2x2xf32>
    %28 = arith.addf %25, %27 : vector<2x2xf32>
    %cst_15 = arith.constant 0.000000e+00 : f32
    %29 = vector.broadcast %cst_15 : f32 to vector<2x2xf32>
    %30 = arith.maximumf %28, %29 : vector<2x2xf32>
    %c0_16 = arith.constant 0 : index
    %c0_17 = arith.constant 0 : index
    %31 = vector.load %arg4[%c0_16, %c0_17] : memref<2x32xf32, #tpu.memory_space<vmem>>, vector<2x32xf32>
    %cst_18 = arith.constant dense<0.000000e+00> : vector<2x32xf32>
    %32 = tpu.matmul %30, %31, %cst_18 {dimension_numbers = #tpu.dot_dimension_numbers<[1], [0], [0], [1], [0, 0, 1, 1], [], []>} : vector<2x2xf32>, vector<2x32xf32>, vector<2x32xf32> -> vector<2x32xf32>
    %c0_19 = arith.constant 0 : index
    %c0_20 = arith.constant 0 : index
    %33 = vector.load %arg5[%c0_19, %c0_20] : memref<1x32xf32, #tpu.memory_space<vmem>>, vector<1x32xf32>
    %34 = vector.broadcast %33 : vector<1x32xf32> to vector<2x32xf32>
    %35 = arith.addf %32, %34 : vector<2x32xf32>
    %36 = vector.extract_strided_slice %35 {offsets = [0, 0], sizes = [1, 32], strides = [1, 1]} : vector<2x32xf32> to vector<1x32xf32>
    %37 = vector.extract_strided_slice %35 {offsets = [1, 0], sizes = [1, 32], strides = [1, 1]} : vector<2x32xf32> to vector<1x32xf32>
    %38 = arith.addf %36, %37 : vector<1x32xf32>
    %39 = arith.negf %38 : vector<1x32xf32>
    %40 = math.exp %39 : vector<1x32xf32>
    %cst_21 = arith.constant 1.000000e+00 : f32
    %41 = vector.broadcast %cst_21 : f32 to vector<1x32xf32>
    %42 = arith.addf %41, %40 : vector<1x32xf32>
    %43 = arith.divf %41, %42 : vector<1x32xf32>
    %c0_22 = arith.constant 0 : index
    %c0_23 = arith.constant 0 : index
    %c0_24 = arith.constant 0 : index
    %44 = vector.load %arg1[%c0_22, %c0_23, %c0_24] : memref<1x32x256xf32, #tpu.memory_space<vmem>>, vector<1x8x256xf32>
    %45 = vector.extract_strided_slice %43 {offsets = [0, 0], sizes = [1, 8], strides = [1, 1]} : vector<1x32xf32> to vector<1x8xf32>
    %46 = vector.shape_cast %45 : vector<1x8xf32> to vector<1x8x1xf32>
    %47 = vector.broadcast %46 : vector<1x8x1xf32> to vector<1x8x256xf32>
    %48 = arith.mulf %44, %47 : vector<1x8x256xf32>
    %cst_25 = arith.constant dense<0xFF800000> : vector<1x256xf32>
    %49 = vector.multi_reduction <maximumf>, %48, %cst_25 [1] : vector<1x8x256xf32> to vector<1x256xf32>
    %cst_26 = arith.constant dense<0.000000e+00> : vector<1x256xf32>
    %50 = vector.multi_reduction <add>, %48, %cst_26 [1] : vector<1x8x256xf32> to vector<1x256xf32>
    %c0_27 = arith.constant 0 : index
    %c8 = arith.constant 8 : index
    %c0_28 = arith.constant 0 : index
    %51 = vector.load %arg1[%c0_27, %c8, %c0_28] : memref<1x32x256xf32, #tpu.memory_space<vmem>>, vector<1x8x256xf32>
    %52 = vector.extract_strided_slice %43 {offsets = [0, 8], sizes = [1, 8], strides = [1, 1]} : vector<1x32xf32> to vector<1x8xf32>
    %53 = vector.shape_cast %52 : vector<1x8xf32> to vector<1x8x1xf32>
    %54 = vector.broadcast %53 : vector<1x8x1xf32> to vector<1x8x256xf32>
    %55 = arith.mulf %51, %54 : vector<1x8x256xf32>
    %cst_29 = arith.constant dense<0xFF800000> : vector<1x256xf32>
    %56 = vector.multi_reduction <maximumf>, %55, %cst_29 [1] : vector<1x8x256xf32> to vector<1x256xf32>
    %cst_30 = arith.constant dense<0.000000e+00> : vector<1x256xf32>
    %57 = vector.multi_reduction <add>, %55, %cst_30 [1] : vector<1x8x256xf32> to vector<1x256xf32>
    %58 = arith.maximumf %49, %56 : vector<1x256xf32>
    %59 = arith.addf %50, %57 : vector<1x256xf32>
    %c0_31 = arith.constant 0 : index
    %c16 = arith.constant 16 : index
    %c0_32 = arith.constant 0 : index
    %60 = vector.load %arg1[%c0_31, %c16, %c0_32] : memref<1x32x256xf32, #tpu.memory_space<vmem>>, vector<1x8x256xf32>
    %61 = vector.extract_strided_slice %43 {offsets = [0, 16], sizes = [1, 8], strides = [1, 1]} : vector<1x32xf32> to vector<1x8xf32>
    %62 = vector.shape_cast %61 : vector<1x8xf32> to vector<1x8x1xf32>
    %63 = vector.broadcast %62 : vector<1x8x1xf32> to vector<1x8x256xf32>
    %64 = arith.mulf %60, %63 : vector<1x8x256xf32>
    %cst_33 = arith.constant dense<0xFF800000> : vector<1x256xf32>
    %65 = vector.multi_reduction <maximumf>, %64, %cst_33 [1] : vector<1x8x256xf32> to vector<1x256xf32>
    %cst_34 = arith.constant dense<0.000000e+00> : vector<1x256xf32>
    %66 = vector.multi_reduction <add>, %64, %cst_34 [1] : vector<1x8x256xf32> to vector<1x256xf32>
    %67 = arith.maximumf %58, %65 : vector<1x256xf32>
    %68 = arith.addf %59, %66 : vector<1x256xf32>
    %c0_35 = arith.constant 0 : index
    %c24 = arith.constant 24 : index
    %c0_36 = arith.constant 0 : index
    %69 = vector.load %arg1[%c0_35, %c24, %c0_36] : memref<1x32x256xf32, #tpu.memory_space<vmem>>, vector<1x8x256xf32>
    %70 = vector.extract_strided_slice %43 {offsets = [0, 24], sizes = [1, 8], strides = [1, 1]} : vector<1x32xf32> to vector<1x8xf32>
    %71 = vector.shape_cast %70 : vector<1x8xf32> to vector<1x8x1xf32>
    %72 = vector.broadcast %71 : vector<1x8x1xf32> to vector<1x8x256xf32>
    %73 = arith.mulf %69, %72 : vector<1x8x256xf32>
    %cst_37 = arith.constant dense<0xFF800000> : vector<1x256xf32>
    %74 = vector.multi_reduction <maximumf>, %73, %cst_37 [1] : vector<1x8x256xf32> to vector<1x256xf32>
    %cst_38 = arith.constant dense<0.000000e+00> : vector<1x256xf32>
    %75 = vector.multi_reduction <add>, %73, %cst_38 [1] : vector<1x8x256xf32> to vector<1x256xf32>
    %76 = arith.maximumf %67, %74 : vector<1x256xf32>
    %77 = arith.addf %68, %75 : vector<1x256xf32>
    %cst_39 = arith.constant 3.125000e-02 : f32
    %78 = vector.broadcast %cst_39 : f32 to vector<1x256xf32>
    %79 = arith.mulf %77, %78 : vector<1x256xf32>
    %c3_i32 = arith.constant 3 : i32
    %80 = tpu.dynamic_rotate %76 by %c3_i32 dim 1 : vector<1x256xf32>, i32 -> vector<1x256xf32>
    %c-3_i32 = arith.constant -3 : i32
    %81 = vector.broadcast %c-3_i32 : i32 to vector<1x256xi32>
    %82 = arith.addi %16, %81 : vector<1x256xi32>
    %c0_i32_40 = arith.constant 0 : i32
    %83 = vector.broadcast %c0_i32_40 : i32 to vector<1x256xi32>
    %84 = arith.cmpi sge, %82, %83 : vector<1x256xi32>
    %c16_i32_41 = arith.constant 16 : i32
    %85 = vector.broadcast %c16_i32_41 : i32 to vector<1x256xi32>
    %86 = arith.cmpi slt, %82, %85 : vector<1x256xi32>
    %87 = arith.andi %84, %86 : vector<1x256xi1>
    %cst_42 = arith.constant 0.000000e+00 : f32
    %88 = vector.broadcast %cst_42 : f32 to vector<1x256xf32>
    %89 = arith.select %87, %80, %88 : vector<1x256xi1>, vector<1x256xf32>
    %c2_i32 = arith.constant 2 : i32
    %90 = tpu.dynamic_rotate %76 by %c2_i32 dim 1 : vector<1x256xf32>, i32 -> vector<1x256xf32>
    %c-2_i32 = arith.constant -2 : i32
    %91 = vector.broadcast %c-2_i32 : i32 to vector<1x256xi32>
    %92 = arith.addi %16, %91 : vector<1x256xi32>
    %c0_i32_43 = arith.constant 0 : i32
    %93 = vector.broadcast %c0_i32_43 : i32 to vector<1x256xi32>
    %94 = arith.cmpi sge, %92, %93 : vector<1x256xi32>
    %c16_i32_44 = arith.constant 16 : i32
    %95 = vector.broadcast %c16_i32_44 : i32 to vector<1x256xi32>
    %96 = arith.cmpi slt, %92, %95 : vector<1x256xi32>
    %97 = arith.andi %94, %96 : vector<1x256xi1>
    %cst_45 = arith.constant 0.000000e+00 : f32
    %98 = vector.broadcast %cst_45 : f32 to vector<1x256xf32>
    %99 = arith.select %97, %90, %98 : vector<1x256xi1>, vector<1x256xf32>
    %c1_i32_46 = arith.constant 1 : i32
    %100 = tpu.dynamic_rotate %76 by %c1_i32_46 dim 1 : vector<1x256xf32>, i32 -> vector<1x256xf32>
    %c-1_i32 = arith.constant -1 : i32
    %101 = vector.broadcast %c-1_i32 : i32 to vector<1x256xi32>
    %102 = arith.addi %16, %101 : vector<1x256xi32>
    %c0_i32_47 = arith.constant 0 : i32
    %103 = vector.broadcast %c0_i32_47 : i32 to vector<1x256xi32>
    %104 = arith.cmpi sge, %102, %103 : vector<1x256xi32>
    %c16_i32_48 = arith.constant 16 : i32
    %105 = vector.broadcast %c16_i32_48 : i32 to vector<1x256xi32>
    %106 = arith.cmpi slt, %102, %105 : vector<1x256xi32>
    %107 = arith.andi %104, %106 : vector<1x256xi1>
    %cst_49 = arith.constant 0.000000e+00 : f32
    %108 = vector.broadcast %cst_49 : f32 to vector<1x256xf32>
    %109 = arith.select %107, %100, %108 : vector<1x256xi1>, vector<1x256xf32>
    %c255_i32 = arith.constant 255 : i32
    %110 = tpu.dynamic_rotate %76 by %c255_i32 dim 1 : vector<1x256xf32>, i32 -> vector<1x256xf32>
    %c1_i32_50 = arith.constant 1 : i32
    %111 = vector.broadcast %c1_i32_50 : i32 to vector<1x256xi32>
    %112 = arith.addi %16, %111 : vector<1x256xi32>
    %c0_i32_51 = arith.constant 0 : i32
    %113 = vector.broadcast %c0_i32_51 : i32 to vector<1x256xi32>
    %114 = arith.cmpi sge, %112, %113 : vector<1x256xi32>
    %c16_i32_52 = arith.constant 16 : i32
    %115 = vector.broadcast %c16_i32_52 : i32 to vector<1x256xi32>
    %116 = arith.cmpi slt, %112, %115 : vector<1x256xi32>
    %117 = arith.andi %114, %116 : vector<1x256xi1>
    %cst_53 = arith.constant 0.000000e+00 : f32
    %118 = vector.broadcast %cst_53 : f32 to vector<1x256xf32>
    %119 = arith.select %117, %110, %118 : vector<1x256xi1>, vector<1x256xf32>
    %c254_i32 = arith.constant 254 : i32
    %120 = tpu.dynamic_rotate %76 by %c254_i32 dim 1 : vector<1x256xf32>, i32 -> vector<1x256xf32>
    %c2_i32_54 = arith.constant 2 : i32
    %121 = vector.broadcast %c2_i32_54 : i32 to vector<1x256xi32>
    %122 = arith.addi %16, %121 : vector<1x256xi32>
    %c0_i32_55 = arith.constant 0 : i32
    %123 = vector.broadcast %c0_i32_55 : i32 to vector<1x256xi32>
    %124 = arith.cmpi sge, %122, %123 : vector<1x256xi32>
    %c16_i32_56 = arith.constant 16 : i32
    %125 = vector.broadcast %c16_i32_56 : i32 to vector<1x256xi32>
    %126 = arith.cmpi slt, %122, %125 : vector<1x256xi32>
    %127 = arith.andi %124, %126 : vector<1x256xi1>
    %cst_57 = arith.constant 0.000000e+00 : f32
    %128 = vector.broadcast %cst_57 : f32 to vector<1x256xf32>
    %129 = arith.select %127, %120, %128 : vector<1x256xi1>, vector<1x256xf32>
    %c253_i32 = arith.constant 253 : i32
    %130 = tpu.dynamic_rotate %76 by %c253_i32 dim 1 : vector<1x256xf32>, i32 -> vector<1x256xf32>
    %c3_i32_58 = arith.constant 3 : i32
    %131 = vector.broadcast %c3_i32_58 : i32 to vector<1x256xi32>
    %132 = arith.addi %16, %131 : vector<1x256xi32>
    %c0_i32_59 = arith.constant 0 : i32
    %133 = vector.broadcast %c0_i32_59 : i32 to vector<1x256xi32>
    %134 = arith.cmpi sge, %132, %133 : vector<1x256xi32>
    %c16_i32_60 = arith.constant 16 : i32
    %135 = vector.broadcast %c16_i32_60 : i32 to vector<1x256xi32>
    %136 = arith.cmpi slt, %132, %135 : vector<1x256xi32>
    %137 = arith.andi %134, %136 : vector<1x256xi1>
    %cst_61 = arith.constant 0.000000e+00 : f32
    %138 = vector.broadcast %cst_61 : f32 to vector<1x256xf32>
    %139 = arith.select %137, %130, %138 : vector<1x256xi1>, vector<1x256xf32>
    %c3_i32_62 = arith.constant 3 : i32
    %140 = tpu.dynamic_rotate %79 by %c3_i32_62 dim 1 : vector<1x256xf32>, i32 -> vector<1x256xf32>
    %c-3_i32_63 = arith.constant -3 : i32
    %141 = vector.broadcast %c-3_i32_63 : i32 to vector<1x256xi32>
    %142 = arith.addi %16, %141 : vector<1x256xi32>
    %c0_i32_64 = arith.constant 0 : i32
    %143 = vector.broadcast %c0_i32_64 : i32 to vector<1x256xi32>
    %144 = arith.cmpi sge, %142, %143 : vector<1x256xi32>
    %c16_i32_65 = arith.constant 16 : i32
    %145 = vector.broadcast %c16_i32_65 : i32 to vector<1x256xi32>
    %146 = arith.cmpi slt, %142, %145 : vector<1x256xi32>
    %147 = arith.andi %144, %146 : vector<1x256xi1>
    %cst_66 = arith.constant 0.000000e+00 : f32
    %148 = vector.broadcast %cst_66 : f32 to vector<1x256xf32>
    %149 = arith.select %147, %140, %148 : vector<1x256xi1>, vector<1x256xf32>
    %c2_i32_67 = arith.constant 2 : i32
    %150 = tpu.dynamic_rotate %79 by %c2_i32_67 dim 1 : vector<1x256xf32>, i32 -> vector<1x256xf32>
    %c-2_i32_68 = arith.constant -2 : i32
    %151 = vector.broadcast %c-2_i32_68 : i32 to vector<1x256xi32>
    %152 = arith.addi %16, %151 : vector<1x256xi32>
    %c0_i32_69 = arith.constant 0 : i32
    %153 = vector.broadcast %c0_i32_69 : i32 to vector<1x256xi32>
    %154 = arith.cmpi sge, %152, %153 : vector<1x256xi32>
    %c16_i32_70 = arith.constant 16 : i32
    %155 = vector.broadcast %c16_i32_70 : i32 to vector<1x256xi32>
    %156 = arith.cmpi slt, %152, %155 : vector<1x256xi32>
    %157 = arith.andi %154, %156 : vector<1x256xi1>
    %cst_71 = arith.constant 0.000000e+00 : f32
    %158 = vector.broadcast %cst_71 : f32 to vector<1x256xf32>
    %159 = arith.select %157, %150, %158 : vector<1x256xi1>, vector<1x256xf32>
    %c1_i32_72 = arith.constant 1 : i32
    %160 = tpu.dynamic_rotate %79 by %c1_i32_72 dim 1 : vector<1x256xf32>, i32 -> vector<1x256xf32>
    %c-1_i32_73 = arith.constant -1 : i32
    %161 = vector.broadcast %c-1_i32_73 : i32 to vector<1x256xi32>
    %162 = arith.addi %16, %161 : vector<1x256xi32>
    %c0_i32_74 = arith.constant 0 : i32
    %163 = vector.broadcast %c0_i32_74 : i32 to vector<1x256xi32>
    %164 = arith.cmpi sge, %162, %163 : vector<1x256xi32>
    %c16_i32_75 = arith.constant 16 : i32
    %165 = vector.broadcast %c16_i32_75 : i32 to vector<1x256xi32>
    %166 = arith.cmpi slt, %162, %165 : vector<1x256xi32>
    %167 = arith.andi %164, %166 : vector<1x256xi1>
    %cst_76 = arith.constant 0.000000e+00 : f32
    %168 = vector.broadcast %cst_76 : f32 to vector<1x256xf32>
    %169 = arith.select %167, %160, %168 : vector<1x256xi1>, vector<1x256xf32>
    %c255_i32_77 = arith.constant 255 : i32
    %170 = tpu.dynamic_rotate %79 by %c255_i32_77 dim 1 : vector<1x256xf32>, i32 -> vector<1x256xf32>
    %c1_i32_78 = arith.constant 1 : i32
    %171 = vector.broadcast %c1_i32_78 : i32 to vector<1x256xi32>
    %172 = arith.addi %16, %171 : vector<1x256xi32>
    %c0_i32_79 = arith.constant 0 : i32
    %173 = vector.broadcast %c0_i32_79 : i32 to vector<1x256xi32>
    %174 = arith.cmpi sge, %172, %173 : vector<1x256xi32>
    %c16_i32_80 = arith.constant 16 : i32
    %175 = vector.broadcast %c16_i32_80 : i32 to vector<1x256xi32>
    %176 = arith.cmpi slt, %172, %175 : vector<1x256xi32>
    %177 = arith.andi %174, %176 : vector<1x256xi1>
    %cst_81 = arith.constant 0.000000e+00 : f32
    %178 = vector.broadcast %cst_81 : f32 to vector<1x256xf32>
    %179 = arith.select %177, %170, %178 : vector<1x256xi1>, vector<1x256xf32>
    %c254_i32_82 = arith.constant 254 : i32
    %180 = tpu.dynamic_rotate %79 by %c254_i32_82 dim 1 : vector<1x256xf32>, i32 -> vector<1x256xf32>
    %c2_i32_83 = arith.constant 2 : i32
    %181 = vector.broadcast %c2_i32_83 : i32 to vector<1x256xi32>
    %182 = arith.addi %16, %181 : vector<1x256xi32>
    %c0_i32_84 = arith.constant 0 : i32
    %183 = vector.broadcast %c0_i32_84 : i32 to vector<1x256xi32>
    %184 = arith.cmpi sge, %182, %183 : vector<1x256xi32>
    %c16_i32_85 = arith.constant 16 : i32
    %185 = vector.broadcast %c16_i32_85 : i32 to vector<1x256xi32>
    %186 = arith.cmpi slt, %182, %185 : vector<1x256xi32>
    %187 = arith.andi %184, %186 : vector<1x256xi1>
    %cst_86 = arith.constant 0.000000e+00 : f32
    %188 = vector.broadcast %cst_86 : f32 to vector<1x256xf32>
    %189 = arith.select %187, %180, %188 : vector<1x256xi1>, vector<1x256xf32>
    %c253_i32_87 = arith.constant 253 : i32
    %190 = tpu.dynamic_rotate %79 by %c253_i32_87 dim 1 : vector<1x256xf32>, i32 -> vector<1x256xf32>
    %c3_i32_88 = arith.constant 3 : i32
    %191 = vector.broadcast %c3_i32_88 : i32 to vector<1x256xi32>
    %192 = arith.addi %16, %191 : vector<1x256xi32>
    %c0_i32_89 = arith.constant 0 : i32
    %193 = vector.broadcast %c0_i32_89 : i32 to vector<1x256xi32>
    %194 = arith.cmpi sge, %192, %193 : vector<1x256xi32>
    %c16_i32_90 = arith.constant 16 : i32
    %195 = vector.broadcast %c16_i32_90 : i32 to vector<1x256xi32>
    %196 = arith.cmpi slt, %192, %195 : vector<1x256xi32>
    %197 = arith.andi %194, %196 : vector<1x256xi1>
    %cst_91 = arith.constant 0.000000e+00 : f32
    %198 = vector.broadcast %cst_91 : f32 to vector<1x256xf32>
    %199 = arith.select %197, %190, %198 : vector<1x256xi1>, vector<1x256xf32>
    %c0_92 = arith.constant 0 : index
    %200 = memref.load %arg6[%c0_92] : memref<98xf32, #tpu.memory_space<smem>>
    %201 = vector.broadcast %200 : f32 to vector<1x256xf32>
    %202 = arith.mulf %201, %89 : vector<1x256xf32>
    %c1 = arith.constant 1 : index
    %203 = memref.load %arg6[%c1] : memref<98xf32, #tpu.memory_space<smem>>
    %204 = vector.broadcast %203 : f32 to vector<1x256xf32>
    %205 = arith.mulf %204, %99 : vector<1x256xf32>
    %206 = arith.addf %202, %205 : vector<1x256xf32>
    %c2 = arith.constant 2 : index
    %207 = memref.load %arg6[%c2] : memref<98xf32, #tpu.memory_space<smem>>
    %208 = vector.broadcast %207 : f32 to vector<1x256xf32>
    %209 = arith.mulf %208, %109 : vector<1x256xf32>
    %210 = arith.addf %206, %209 : vector<1x256xf32>
    %c3 = arith.constant 3 : index
    %211 = memref.load %arg6[%c3] : memref<98xf32, #tpu.memory_space<smem>>
    %212 = vector.broadcast %211 : f32 to vector<1x256xf32>
    %213 = arith.mulf %212, %76 : vector<1x256xf32>
    %214 = arith.addf %210, %213 : vector<1x256xf32>
    %c4 = arith.constant 4 : index
    %215 = memref.load %arg6[%c4] : memref<98xf32, #tpu.memory_space<smem>>
    %216 = vector.broadcast %215 : f32 to vector<1x256xf32>
    %217 = arith.mulf %216, %119 : vector<1x256xf32>
    %218 = arith.addf %214, %217 : vector<1x256xf32>
    %c5 = arith.constant 5 : index
    %219 = memref.load %arg6[%c5] : memref<98xf32, #tpu.memory_space<smem>>
    %220 = vector.broadcast %219 : f32 to vector<1x256xf32>
    %221 = arith.mulf %220, %129 : vector<1x256xf32>
    %222 = arith.addf %218, %221 : vector<1x256xf32>
    %c6 = arith.constant 6 : index
    %223 = memref.load %arg6[%c6] : memref<98xf32, #tpu.memory_space<smem>>
    %224 = vector.broadcast %223 : f32 to vector<1x256xf32>
    %225 = arith.mulf %224, %139 : vector<1x256xf32>
    %226 = arith.addf %222, %225 : vector<1x256xf32>
    %c49 = arith.constant 49 : index
    %227 = memref.load %arg6[%c49] : memref<98xf32, #tpu.memory_space<smem>>
    %228 = vector.broadcast %227 : f32 to vector<1x256xf32>
    %229 = arith.mulf %228, %149 : vector<1x256xf32>
    %230 = arith.addf %226, %229 : vector<1x256xf32>
    %c50 = arith.constant 50 : index
    %231 = memref.load %arg6[%c50] : memref<98xf32, #tpu.memory_space<smem>>
    %232 = vector.broadcast %231 : f32 to vector<1x256xf32>
    %233 = arith.mulf %232, %159 : vector<1x256xf32>
    %234 = arith.addf %230, %233 : vector<1x256xf32>
    %c51 = arith.constant 51 : index
    %235 = memref.load %arg6[%c51] : memref<98xf32, #tpu.memory_space<smem>>
    %236 = vector.broadcast %235 : f32 to vector<1x256xf32>
    %237 = arith.mulf %236, %169 : vector<1x256xf32>
    %238 = arith.addf %234, %237 : vector<1x256xf32>
    %c52 = arith.constant 52 : index
    %239 = memref.load %arg6[%c52] : memref<98xf32, #tpu.memory_space<smem>>
    %240 = vector.broadcast %239 : f32 to vector<1x256xf32>
    %241 = arith.mulf %240, %79 : vector<1x256xf32>
    %242 = arith.addf %238, %241 : vector<1x256xf32>
    %c53 = arith.constant 53 : index
    %243 = memref.load %arg6[%c53] : memref<98xf32, #tpu.memory_space<smem>>
    %244 = vector.broadcast %243 : f32 to vector<1x256xf32>
    %245 = arith.mulf %244, %179 : vector<1x256xf32>
    %246 = arith.addf %242, %245 : vector<1x256xf32>
    %c54 = arith.constant 54 : index
    %247 = memref.load %arg6[%c54] : memref<98xf32, #tpu.memory_space<smem>>
    %248 = vector.broadcast %247 : f32 to vector<1x256xf32>
    %249 = arith.mulf %248, %189 : vector<1x256xf32>
    %250 = arith.addf %246, %249 : vector<1x256xf32>
    %c55 = arith.constant 55 : index
    %251 = memref.load %arg6[%c55] : memref<98xf32, #tpu.memory_space<smem>>
    %252 = vector.broadcast %251 : f32 to vector<1x256xf32>
    %253 = arith.mulf %252, %199 : vector<1x256xf32>
    %254 = arith.addf %250, %253 : vector<1x256xf32>
    %c48_i32 = arith.constant 48 : i32
    %255 = tpu.dynamic_rotate %254 by %c48_i32 dim 1 : vector<1x256xf32>, i32 -> vector<1x256xf32>
    %c-48_i32 = arith.constant -48 : i32
    %256 = vector.broadcast %c-48_i32 : i32 to vector<1x256xi32>
    %257 = arith.addi %0, %256 : vector<1x256xi32>
    %c0_i32_93 = arith.constant 0 : i32
    %258 = vector.broadcast %c0_i32_93 : i32 to vector<1x256xi32>
    %259 = arith.cmpi sge, %257, %258 : vector<1x256xi32>
    %c256_i32 = arith.constant 256 : i32
    %260 = vector.broadcast %c256_i32 : i32 to vector<1x256xi32>
    %261 = arith.cmpi slt, %257, %260 : vector<1x256xi32>
    %262 = arith.andi %259, %261 : vector<1x256xi1>
    %cst_94 = arith.constant 0.000000e+00 : f32
    %263 = vector.broadcast %cst_94 : f32 to vector<1x256xf32>
    %264 = arith.select %262, %255, %263 : vector<1x256xi1>, vector<1x256xf32>
    %c7 = arith.constant 7 : index
    %265 = memref.load %arg6[%c7] : memref<98xf32, #tpu.memory_space<smem>>
    %266 = vector.broadcast %265 : f32 to vector<1x256xf32>
    %267 = arith.mulf %266, %89 : vector<1x256xf32>
    %c8_95 = arith.constant 8 : index
    %268 = memref.load %arg6[%c8_95] : memref<98xf32, #tpu.memory_space<smem>>
    %269 = vector.broadcast %268 : f32 to vector<1x256xf32>
    %270 = arith.mulf %269, %99 : vector<1x256xf32>
    %271 = arith.addf %267, %270 : vector<1x256xf32>
    %c9 = arith.constant 9 : index
    %272 = memref.load %arg6[%c9] : memref<98xf32, #tpu.memory_space<smem>>
    %273 = vector.broadcast %272 : f32 to vector<1x256xf32>
    %274 = arith.mulf %273, %109 : vector<1x256xf32>
    %275 = arith.addf %271, %274 : vector<1x256xf32>
    %c10 = arith.constant 10 : index
    %276 = memref.load %arg6[%c10] : memref<98xf32, #tpu.memory_space<smem>>
    %277 = vector.broadcast %276 : f32 to vector<1x256xf32>
    %278 = arith.mulf %277, %76 : vector<1x256xf32>
    %279 = arith.addf %275, %278 : vector<1x256xf32>
    %c11 = arith.constant 11 : index
    %280 = memref.load %arg6[%c11] : memref<98xf32, #tpu.memory_space<smem>>
    %281 = vector.broadcast %280 : f32 to vector<1x256xf32>
    %282 = arith.mulf %281, %119 : vector<1x256xf32>
    %283 = arith.addf %279, %282 : vector<1x256xf32>
    %c12 = arith.constant 12 : index
    %284 = memref.load %arg6[%c12] : memref<98xf32, #tpu.memory_space<smem>>
    %285 = vector.broadcast %284 : f32 to vector<1x256xf32>
    %286 = arith.mulf %285, %129 : vector<1x256xf32>
    %287 = arith.addf %283, %286 : vector<1x256xf32>
    %c13 = arith.constant 13 : index
    %288 = memref.load %arg6[%c13] : memref<98xf32, #tpu.memory_space<smem>>
    %289 = vector.broadcast %288 : f32 to vector<1x256xf32>
    %290 = arith.mulf %289, %139 : vector<1x256xf32>
    %291 = arith.addf %287, %290 : vector<1x256xf32>
    %c56 = arith.constant 56 : index
    %292 = memref.load %arg6[%c56] : memref<98xf32, #tpu.memory_space<smem>>
    %293 = vector.broadcast %292 : f32 to vector<1x256xf32>
    %294 = arith.mulf %293, %149 : vector<1x256xf32>
    %295 = arith.addf %291, %294 : vector<1x256xf32>
    %c57 = arith.constant 57 : index
    %296 = memref.load %arg6[%c57] : memref<98xf32, #tpu.memory_space<smem>>
    %297 = vector.broadcast %296 : f32 to vector<1x256xf32>
    %298 = arith.mulf %297, %159 : vector<1x256xf32>
    %299 = arith.addf %295, %298 : vector<1x256xf32>
    %c58 = arith.constant 58 : index
    %300 = memref.load %arg6[%c58] : memref<98xf32, #tpu.memory_space<smem>>
    %301 = vector.broadcast %300 : f32 to vector<1x256xf32>
    %302 = arith.mulf %301, %169 : vector<1x256xf32>
    %303 = arith.addf %299, %302 : vector<1x256xf32>
    %c59 = arith.constant 59 : index
    %304 = memref.load %arg6[%c59] : memref<98xf32, #tpu.memory_space<smem>>
    %305 = vector.broadcast %304 : f32 to vector<1x256xf32>
    %306 = arith.mulf %305, %79 : vector<1x256xf32>
    %307 = arith.addf %303, %306 : vector<1x256xf32>
    %c60 = arith.constant 60 : index
    %308 = memref.load %arg6[%c60] : memref<98xf32, #tpu.memory_space<smem>>
    %309 = vector.broadcast %308 : f32 to vector<1x256xf32>
    %310 = arith.mulf %309, %179 : vector<1x256xf32>
    %311 = arith.addf %307, %310 : vector<1x256xf32>
    %c61 = arith.constant 61 : index
    %312 = memref.load %arg6[%c61] : memref<98xf32, #tpu.memory_space<smem>>
    %313 = vector.broadcast %312 : f32 to vector<1x256xf32>
    %314 = arith.mulf %313, %189 : vector<1x256xf32>
    %315 = arith.addf %311, %314 : vector<1x256xf32>
    %c62 = arith.constant 62 : index
    %316 = memref.load %arg6[%c62] : memref<98xf32, #tpu.memory_space<smem>>
    %317 = vector.broadcast %316 : f32 to vector<1x256xf32>
    %318 = arith.mulf %317, %199 : vector<1x256xf32>
    %319 = arith.addf %315, %318 : vector<1x256xf32>
    %c32_i32 = arith.constant 32 : i32
    %320 = tpu.dynamic_rotate %319 by %c32_i32 dim 1 : vector<1x256xf32>, i32 -> vector<1x256xf32>
    %c-32_i32 = arith.constant -32 : i32
    %321 = vector.broadcast %c-32_i32 : i32 to vector<1x256xi32>
    %322 = arith.addi %0, %321 : vector<1x256xi32>
    %c0_i32_96 = arith.constant 0 : i32
    %323 = vector.broadcast %c0_i32_96 : i32 to vector<1x256xi32>
    %324 = arith.cmpi sge, %322, %323 : vector<1x256xi32>
    %c256_i32_97 = arith.constant 256 : i32
    %325 = vector.broadcast %c256_i32_97 : i32 to vector<1x256xi32>
    %326 = arith.cmpi slt, %322, %325 : vector<1x256xi32>
    %327 = arith.andi %324, %326 : vector<1x256xi1>
    %cst_98 = arith.constant 0.000000e+00 : f32
    %328 = vector.broadcast %cst_98 : f32 to vector<1x256xf32>
    %329 = arith.select %327, %320, %328 : vector<1x256xi1>, vector<1x256xf32>
    %330 = arith.addf %264, %329 : vector<1x256xf32>
    %c14 = arith.constant 14 : index
    %331 = memref.load %arg6[%c14] : memref<98xf32, #tpu.memory_space<smem>>
    %332 = vector.broadcast %331 : f32 to vector<1x256xf32>
    %333 = arith.mulf %332, %89 : vector<1x256xf32>
    %c15 = arith.constant 15 : index
    %334 = memref.load %arg6[%c15] : memref<98xf32, #tpu.memory_space<smem>>
    %335 = vector.broadcast %334 : f32 to vector<1x256xf32>
    %336 = arith.mulf %335, %99 : vector<1x256xf32>
    %337 = arith.addf %333, %336 : vector<1x256xf32>
    %c16_99 = arith.constant 16 : index
    %338 = memref.load %arg6[%c16_99] : memref<98xf32, #tpu.memory_space<smem>>
    %339 = vector.broadcast %338 : f32 to vector<1x256xf32>
    %340 = arith.mulf %339, %109 : vector<1x256xf32>
    %341 = arith.addf %337, %340 : vector<1x256xf32>
    %c17 = arith.constant 17 : index
    %342 = memref.load %arg6[%c17] : memref<98xf32, #tpu.memory_space<smem>>
    %343 = vector.broadcast %342 : f32 to vector<1x256xf32>
    %344 = arith.mulf %343, %76 : vector<1x256xf32>
    %345 = arith.addf %341, %344 : vector<1x256xf32>
    %c18 = arith.constant 18 : index
    %346 = memref.load %arg6[%c18] : memref<98xf32, #tpu.memory_space<smem>>
    %347 = vector.broadcast %346 : f32 to vector<1x256xf32>
    %348 = arith.mulf %347, %119 : vector<1x256xf32>
    %349 = arith.addf %345, %348 : vector<1x256xf32>
    %c19 = arith.constant 19 : index
    %350 = memref.load %arg6[%c19] : memref<98xf32, #tpu.memory_space<smem>>
    %351 = vector.broadcast %350 : f32 to vector<1x256xf32>
    %352 = arith.mulf %351, %129 : vector<1x256xf32>
    %353 = arith.addf %349, %352 : vector<1x256xf32>
    %c20 = arith.constant 20 : index
    %354 = memref.load %arg6[%c20] : memref<98xf32, #tpu.memory_space<smem>>
    %355 = vector.broadcast %354 : f32 to vector<1x256xf32>
    %356 = arith.mulf %355, %139 : vector<1x256xf32>
    %357 = arith.addf %353, %356 : vector<1x256xf32>
    %c63 = arith.constant 63 : index
    %358 = memref.load %arg6[%c63] : memref<98xf32, #tpu.memory_space<smem>>
    %359 = vector.broadcast %358 : f32 to vector<1x256xf32>
    %360 = arith.mulf %359, %149 : vector<1x256xf32>
    %361 = arith.addf %357, %360 : vector<1x256xf32>
    %c64 = arith.constant 64 : index
    %362 = memref.load %arg6[%c64] : memref<98xf32, #tpu.memory_space<smem>>
    %363 = vector.broadcast %362 : f32 to vector<1x256xf32>
    %364 = arith.mulf %363, %159 : vector<1x256xf32>
    %365 = arith.addf %361, %364 : vector<1x256xf32>
    %c65 = arith.constant 65 : index
    %366 = memref.load %arg6[%c65] : memref<98xf32, #tpu.memory_space<smem>>
    %367 = vector.broadcast %366 : f32 to vector<1x256xf32>
    %368 = arith.mulf %367, %169 : vector<1x256xf32>
    %369 = arith.addf %365, %368 : vector<1x256xf32>
    %c66 = arith.constant 66 : index
    %370 = memref.load %arg6[%c66] : memref<98xf32, #tpu.memory_space<smem>>
    %371 = vector.broadcast %370 : f32 to vector<1x256xf32>
    %372 = arith.mulf %371, %79 : vector<1x256xf32>
    %373 = arith.addf %369, %372 : vector<1x256xf32>
    %c67 = arith.constant 67 : index
    %374 = memref.load %arg6[%c67] : memref<98xf32, #tpu.memory_space<smem>>
    %375 = vector.broadcast %374 : f32 to vector<1x256xf32>
    %376 = arith.mulf %375, %179 : vector<1x256xf32>
    %377 = arith.addf %373, %376 : vector<1x256xf32>
    %c68 = arith.constant 68 : index
    %378 = memref.load %arg6[%c68] : memref<98xf32, #tpu.memory_space<smem>>
    %379 = vector.broadcast %378 : f32 to vector<1x256xf32>
    %380 = arith.mulf %379, %189 : vector<1x256xf32>
    %381 = arith.addf %377, %380 : vector<1x256xf32>
    %c69 = arith.constant 69 : index
    %382 = memref.load %arg6[%c69] : memref<98xf32, #tpu.memory_space<smem>>
    %383 = vector.broadcast %382 : f32 to vector<1x256xf32>
    %384 = arith.mulf %383, %199 : vector<1x256xf32>
    %385 = arith.addf %381, %384 : vector<1x256xf32>
    %c16_i32_100 = arith.constant 16 : i32
    %386 = tpu.dynamic_rotate %385 by %c16_i32_100 dim 1 : vector<1x256xf32>, i32 -> vector<1x256xf32>
    %c-16_i32 = arith.constant -16 : i32
    %387 = vector.broadcast %c-16_i32 : i32 to vector<1x256xi32>
    %388 = arith.addi %0, %387 : vector<1x256xi32>
    %c0_i32_101 = arith.constant 0 : i32
    %389 = vector.broadcast %c0_i32_101 : i32 to vector<1x256xi32>
    %390 = arith.cmpi sge, %388, %389 : vector<1x256xi32>
    %c256_i32_102 = arith.constant 256 : i32
    %391 = vector.broadcast %c256_i32_102 : i32 to vector<1x256xi32>
    %392 = arith.cmpi slt, %388, %391 : vector<1x256xi32>
    %393 = arith.andi %390, %392 : vector<1x256xi1>
    %cst_103 = arith.constant 0.000000e+00 : f32
    %394 = vector.broadcast %cst_103 : f32 to vector<1x256xf32>
    %395 = arith.select %393, %386, %394 : vector<1x256xi1>, vector<1x256xf32>
    %396 = arith.addf %330, %395 : vector<1x256xf32>
    %c21 = arith.constant 21 : index
    %397 = memref.load %arg6[%c21] : memref<98xf32, #tpu.memory_space<smem>>
    %398 = vector.broadcast %397 : f32 to vector<1x256xf32>
    %399 = arith.mulf %398, %89 : vector<1x256xf32>
    %c22 = arith.constant 22 : index
    %400 = memref.load %arg6[%c22] : memref<98xf32, #tpu.memory_space<smem>>
    %401 = vector.broadcast %400 : f32 to vector<1x256xf32>
    %402 = arith.mulf %401, %99 : vector<1x256xf32>
    %403 = arith.addf %399, %402 : vector<1x256xf32>
    %c23 = arith.constant 23 : index
    %404 = memref.load %arg6[%c23] : memref<98xf32, #tpu.memory_space<smem>>
    %405 = vector.broadcast %404 : f32 to vector<1x256xf32>
    %406 = arith.mulf %405, %109 : vector<1x256xf32>
    %407 = arith.addf %403, %406 : vector<1x256xf32>
    %c24_104 = arith.constant 24 : index
    %408 = memref.load %arg6[%c24_104] : memref<98xf32, #tpu.memory_space<smem>>
    %409 = vector.broadcast %408 : f32 to vector<1x256xf32>
    %410 = arith.mulf %409, %76 : vector<1x256xf32>
    %411 = arith.addf %407, %410 : vector<1x256xf32>
    %c25 = arith.constant 25 : index
    %412 = memref.load %arg6[%c25] : memref<98xf32, #tpu.memory_space<smem>>
    %413 = vector.broadcast %412 : f32 to vector<1x256xf32>
    %414 = arith.mulf %413, %119 : vector<1x256xf32>
    %415 = arith.addf %411, %414 : vector<1x256xf32>
    %c26 = arith.constant 26 : index
    %416 = memref.load %arg6[%c26] : memref<98xf32, #tpu.memory_space<smem>>
    %417 = vector.broadcast %416 : f32 to vector<1x256xf32>
    %418 = arith.mulf %417, %129 : vector<1x256xf32>
    %419 = arith.addf %415, %418 : vector<1x256xf32>
    %c27 = arith.constant 27 : index
    %420 = memref.load %arg6[%c27] : memref<98xf32, #tpu.memory_space<smem>>
    %421 = vector.broadcast %420 : f32 to vector<1x256xf32>
    %422 = arith.mulf %421, %139 : vector<1x256xf32>
    %423 = arith.addf %419, %422 : vector<1x256xf32>
    %c70 = arith.constant 70 : index
    %424 = memref.load %arg6[%c70] : memref<98xf32, #tpu.memory_space<smem>>
    %425 = vector.broadcast %424 : f32 to vector<1x256xf32>
    %426 = arith.mulf %425, %149 : vector<1x256xf32>
    %427 = arith.addf %423, %426 : vector<1x256xf32>
    %c71 = arith.constant 71 : index
    %428 = memref.load %arg6[%c71] : memref<98xf32, #tpu.memory_space<smem>>
    %429 = vector.broadcast %428 : f32 to vector<1x256xf32>
    %430 = arith.mulf %429, %159 : vector<1x256xf32>
    %431 = arith.addf %427, %430 : vector<1x256xf32>
    %c72 = arith.constant 72 : index
    %432 = memref.load %arg6[%c72] : memref<98xf32, #tpu.memory_space<smem>>
    %433 = vector.broadcast %432 : f32 to vector<1x256xf32>
    %434 = arith.mulf %433, %169 : vector<1x256xf32>
    %435 = arith.addf %431, %434 : vector<1x256xf32>
    %c73 = arith.constant 73 : index
    %436 = memref.load %arg6[%c73] : memref<98xf32, #tpu.memory_space<smem>>
    %437 = vector.broadcast %436 : f32 to vector<1x256xf32>
    %438 = arith.mulf %437, %79 : vector<1x256xf32>
    %439 = arith.addf %435, %438 : vector<1x256xf32>
    %c74 = arith.constant 74 : index
    %440 = memref.load %arg6[%c74] : memref<98xf32, #tpu.memory_space<smem>>
    %441 = vector.broadcast %440 : f32 to vector<1x256xf32>
    %442 = arith.mulf %441, %179 : vector<1x256xf32>
    %443 = arith.addf %439, %442 : vector<1x256xf32>
    %c75 = arith.constant 75 : index
    %444 = memref.load %arg6[%c75] : memref<98xf32, #tpu.memory_space<smem>>
    %445 = vector.broadcast %444 : f32 to vector<1x256xf32>
    %446 = arith.mulf %445, %189 : vector<1x256xf32>
    %447 = arith.addf %443, %446 : vector<1x256xf32>
    %c76 = arith.constant 76 : index
    %448 = memref.load %arg6[%c76] : memref<98xf32, #tpu.memory_space<smem>>
    %449 = vector.broadcast %448 : f32 to vector<1x256xf32>
    %450 = arith.mulf %449, %199 : vector<1x256xf32>
    %451 = arith.addf %447, %450 : vector<1x256xf32>
    %452 = arith.addf %396, %451 : vector<1x256xf32>
    %c28 = arith.constant 28 : index
    %453 = memref.load %arg6[%c28] : memref<98xf32, #tpu.memory_space<smem>>
    %454 = vector.broadcast %453 : f32 to vector<1x256xf32>
    %455 = arith.mulf %454, %89 : vector<1x256xf32>
    %c29 = arith.constant 29 : index
    %456 = memref.load %arg6[%c29] : memref<98xf32, #tpu.memory_space<smem>>
    %457 = vector.broadcast %456 : f32 to vector<1x256xf32>
    %458 = arith.mulf %457, %99 : vector<1x256xf32>
    %459 = arith.addf %455, %458 : vector<1x256xf32>
    %c30 = arith.constant 30 : index
    %460 = memref.load %arg6[%c30] : memref<98xf32, #tpu.memory_space<smem>>
    %461 = vector.broadcast %460 : f32 to vector<1x256xf32>
    %462 = arith.mulf %461, %109 : vector<1x256xf32>
    %463 = arith.addf %459, %462 : vector<1x256xf32>
    %c31 = arith.constant 31 : index
    %464 = memref.load %arg6[%c31] : memref<98xf32, #tpu.memory_space<smem>>
    %465 = vector.broadcast %464 : f32 to vector<1x256xf32>
    %466 = arith.mulf %465, %76 : vector<1x256xf32>
    %467 = arith.addf %463, %466 : vector<1x256xf32>
    %c32 = arith.constant 32 : index
    %468 = memref.load %arg6[%c32] : memref<98xf32, #tpu.memory_space<smem>>
    %469 = vector.broadcast %468 : f32 to vector<1x256xf32>
    %470 = arith.mulf %469, %119 : vector<1x256xf32>
    %471 = arith.addf %467, %470 : vector<1x256xf32>
    %c33 = arith.constant 33 : index
    %472 = memref.load %arg6[%c33] : memref<98xf32, #tpu.memory_space<smem>>
    %473 = vector.broadcast %472 : f32 to vector<1x256xf32>
    %474 = arith.mulf %473, %129 : vector<1x256xf32>
    %475 = arith.addf %471, %474 : vector<1x256xf32>
    %c34 = arith.constant 34 : index
    %476 = memref.load %arg6[%c34] : memref<98xf32, #tpu.memory_space<smem>>
    %477 = vector.broadcast %476 : f32 to vector<1x256xf32>
    %478 = arith.mulf %477, %139 : vector<1x256xf32>
    %479 = arith.addf %475, %478 : vector<1x256xf32>
    %c77 = arith.constant 77 : index
    %480 = memref.load %arg6[%c77] : memref<98xf32, #tpu.memory_space<smem>>
    %481 = vector.broadcast %480 : f32 to vector<1x256xf32>
    %482 = arith.mulf %481, %149 : vector<1x256xf32>
    %483 = arith.addf %479, %482 : vector<1x256xf32>
    %c78 = arith.constant 78 : index
    %484 = memref.load %arg6[%c78] : memref<98xf32, #tpu.memory_space<smem>>
    %485 = vector.broadcast %484 : f32 to vector<1x256xf32>
    %486 = arith.mulf %485, %159 : vector<1x256xf32>
    %487 = arith.addf %483, %486 : vector<1x256xf32>
    %c79 = arith.constant 79 : index
    %488 = memref.load %arg6[%c79] : memref<98xf32, #tpu.memory_space<smem>>
    %489 = vector.broadcast %488 : f32 to vector<1x256xf32>
    %490 = arith.mulf %489, %169 : vector<1x256xf32>
    %491 = arith.addf %487, %490 : vector<1x256xf32>
    %c80 = arith.constant 80 : index
    %492 = memref.load %arg6[%c80] : memref<98xf32, #tpu.memory_space<smem>>
    %493 = vector.broadcast %492 : f32 to vector<1x256xf32>
    %494 = arith.mulf %493, %79 : vector<1x256xf32>
    %495 = arith.addf %491, %494 : vector<1x256xf32>
    %c81 = arith.constant 81 : index
    %496 = memref.load %arg6[%c81] : memref<98xf32, #tpu.memory_space<smem>>
    %497 = vector.broadcast %496 : f32 to vector<1x256xf32>
    %498 = arith.mulf %497, %179 : vector<1x256xf32>
    %499 = arith.addf %495, %498 : vector<1x256xf32>
    %c82 = arith.constant 82 : index
    %500 = memref.load %arg6[%c82] : memref<98xf32, #tpu.memory_space<smem>>
    %501 = vector.broadcast %500 : f32 to vector<1x256xf32>
    %502 = arith.mulf %501, %189 : vector<1x256xf32>
    %503 = arith.addf %499, %502 : vector<1x256xf32>
    %c83 = arith.constant 83 : index
    %504 = memref.load %arg6[%c83] : memref<98xf32, #tpu.memory_space<smem>>
    %505 = vector.broadcast %504 : f32 to vector<1x256xf32>
    %506 = arith.mulf %505, %199 : vector<1x256xf32>
    %507 = arith.addf %503, %506 : vector<1x256xf32>
    %c240_i32 = arith.constant 240 : i32
    %508 = tpu.dynamic_rotate %507 by %c240_i32 dim 1 : vector<1x256xf32>, i32 -> vector<1x256xf32>
    %c16_i32_105 = arith.constant 16 : i32
    %509 = vector.broadcast %c16_i32_105 : i32 to vector<1x256xi32>
    %510 = arith.addi %0, %509 : vector<1x256xi32>
    %c0_i32_106 = arith.constant 0 : i32
    %511 = vector.broadcast %c0_i32_106 : i32 to vector<1x256xi32>
    %512 = arith.cmpi sge, %510, %511 : vector<1x256xi32>
    %c256_i32_107 = arith.constant 256 : i32
    %513 = vector.broadcast %c256_i32_107 : i32 to vector<1x256xi32>
    %514 = arith.cmpi slt, %510, %513 : vector<1x256xi32>
    %515 = arith.andi %512, %514 : vector<1x256xi1>
    %cst_108 = arith.constant 0.000000e+00 : f32
    %516 = vector.broadcast %cst_108 : f32 to vector<1x256xf32>
    %517 = arith.select %515, %508, %516 : vector<1x256xi1>, vector<1x256xf32>
    %518 = arith.addf %452, %517 : vector<1x256xf32>
    %c35 = arith.constant 35 : index
    %519 = memref.load %arg6[%c35] : memref<98xf32, #tpu.memory_space<smem>>
    %520 = vector.broadcast %519 : f32 to vector<1x256xf32>
    %521 = arith.mulf %520, %89 : vector<1x256xf32>
    %c36 = arith.constant 36 : index
    %522 = memref.load %arg6[%c36] : memref<98xf32, #tpu.memory_space<smem>>
    %523 = vector.broadcast %522 : f32 to vector<1x256xf32>
    %524 = arith.mulf %523, %99 : vector<1x256xf32>
    %525 = arith.addf %521, %524 : vector<1x256xf32>
    %c37 = arith.constant 37 : index
    %526 = memref.load %arg6[%c37] : memref<98xf32, #tpu.memory_space<smem>>
    %527 = vector.broadcast %526 : f32 to vector<1x256xf32>
    %528 = arith.mulf %527, %109 : vector<1x256xf32>
    %529 = arith.addf %525, %528 : vector<1x256xf32>
    %c38 = arith.constant 38 : index
    %530 = memref.load %arg6[%c38] : memref<98xf32, #tpu.memory_space<smem>>
    %531 = vector.broadcast %530 : f32 to vector<1x256xf32>
    %532 = arith.mulf %531, %76 : vector<1x256xf32>
    %533 = arith.addf %529, %532 : vector<1x256xf32>
    %c39 = arith.constant 39 : index
    %534 = memref.load %arg6[%c39] : memref<98xf32, #tpu.memory_space<smem>>
    %535 = vector.broadcast %534 : f32 to vector<1x256xf32>
    %536 = arith.mulf %535, %119 : vector<1x256xf32>
    %537 = arith.addf %533, %536 : vector<1x256xf32>
    %c40 = arith.constant 40 : index
    %538 = memref.load %arg6[%c40] : memref<98xf32, #tpu.memory_space<smem>>
    %539 = vector.broadcast %538 : f32 to vector<1x256xf32>
    %540 = arith.mulf %539, %129 : vector<1x256xf32>
    %541 = arith.addf %537, %540 : vector<1x256xf32>
    %c41 = arith.constant 41 : index
    %542 = memref.load %arg6[%c41] : memref<98xf32, #tpu.memory_space<smem>>
    %543 = vector.broadcast %542 : f32 to vector<1x256xf32>
    %544 = arith.mulf %543, %139 : vector<1x256xf32>
    %545 = arith.addf %541, %544 : vector<1x256xf32>
    %c84 = arith.constant 84 : index
    %546 = memref.load %arg6[%c84] : memref<98xf32, #tpu.memory_space<smem>>
    %547 = vector.broadcast %546 : f32 to vector<1x256xf32>
    %548 = arith.mulf %547, %149 : vector<1x256xf32>
    %549 = arith.addf %545, %548 : vector<1x256xf32>
    %c85 = arith.constant 85 : index
    %550 = memref.load %arg6[%c85] : memref<98xf32, #tpu.memory_space<smem>>
    %551 = vector.broadcast %550 : f32 to vector<1x256xf32>
    %552 = arith.mulf %551, %159 : vector<1x256xf32>
    %553 = arith.addf %549, %552 : vector<1x256xf32>
    %c86 = arith.constant 86 : index
    %554 = memref.load %arg6[%c86] : memref<98xf32, #tpu.memory_space<smem>>
    %555 = vector.broadcast %554 : f32 to vector<1x256xf32>
    %556 = arith.mulf %555, %169 : vector<1x256xf32>
    %557 = arith.addf %553, %556 : vector<1x256xf32>
    %c87 = arith.constant 87 : index
    %558 = memref.load %arg6[%c87] : memref<98xf32, #tpu.memory_space<smem>>
    %559 = vector.broadcast %558 : f32 to vector<1x256xf32>
    %560 = arith.mulf %559, %79 : vector<1x256xf32>
    %561 = arith.addf %557, %560 : vector<1x256xf32>
    %c88 = arith.constant 88 : index
    %562 = memref.load %arg6[%c88] : memref<98xf32, #tpu.memory_space<smem>>
    %563 = vector.broadcast %562 : f32 to vector<1x256xf32>
    %564 = arith.mulf %563, %179 : vector<1x256xf32>
    %565 = arith.addf %561, %564 : vector<1x256xf32>
    %c89 = arith.constant 89 : index
    %566 = memref.load %arg6[%c89] : memref<98xf32, #tpu.memory_space<smem>>
    %567 = vector.broadcast %566 : f32 to vector<1x256xf32>
    %568 = arith.mulf %567, %189 : vector<1x256xf32>
    %569 = arith.addf %565, %568 : vector<1x256xf32>
    %c90 = arith.constant 90 : index
    %570 = memref.load %arg6[%c90] : memref<98xf32, #tpu.memory_space<smem>>
    %571 = vector.broadcast %570 : f32 to vector<1x256xf32>
    %572 = arith.mulf %571, %199 : vector<1x256xf32>
    %573 = arith.addf %569, %572 : vector<1x256xf32>
    %c224_i32 = arith.constant 224 : i32
    %574 = tpu.dynamic_rotate %573 by %c224_i32 dim 1 : vector<1x256xf32>, i32 -> vector<1x256xf32>
    %c32_i32_109 = arith.constant 32 : i32
    %575 = vector.broadcast %c32_i32_109 : i32 to vector<1x256xi32>
    %576 = arith.addi %0, %575 : vector<1x256xi32>
    %c0_i32_110 = arith.constant 0 : i32
    %577 = vector.broadcast %c0_i32_110 : i32 to vector<1x256xi32>
    %578 = arith.cmpi sge, %576, %577 : vector<1x256xi32>
    %c256_i32_111 = arith.constant 256 : i32
    %579 = vector.broadcast %c256_i32_111 : i32 to vector<1x256xi32>
    %580 = arith.cmpi slt, %576, %579 : vector<1x256xi32>
    %581 = arith.andi %578, %580 : vector<1x256xi1>
    %cst_112 = arith.constant 0.000000e+00 : f32
    %582 = vector.broadcast %cst_112 : f32 to vector<1x256xf32>
    %583 = arith.select %581, %574, %582 : vector<1x256xi1>, vector<1x256xf32>
    %584 = arith.addf %518, %583 : vector<1x256xf32>
    %c42 = arith.constant 42 : index
    %585 = memref.load %arg6[%c42] : memref<98xf32, #tpu.memory_space<smem>>
    %586 = vector.broadcast %585 : f32 to vector<1x256xf32>
    %587 = arith.mulf %586, %89 : vector<1x256xf32>
    %c43 = arith.constant 43 : index
    %588 = memref.load %arg6[%c43] : memref<98xf32, #tpu.memory_space<smem>>
    %589 = vector.broadcast %588 : f32 to vector<1x256xf32>
    %590 = arith.mulf %589, %99 : vector<1x256xf32>
    %591 = arith.addf %587, %590 : vector<1x256xf32>
    %c44 = arith.constant 44 : index
    %592 = memref.load %arg6[%c44] : memref<98xf32, #tpu.memory_space<smem>>
    %593 = vector.broadcast %592 : f32 to vector<1x256xf32>
    %594 = arith.mulf %593, %109 : vector<1x256xf32>
    %595 = arith.addf %591, %594 : vector<1x256xf32>
    %c45 = arith.constant 45 : index
    %596 = memref.load %arg6[%c45] : memref<98xf32, #tpu.memory_space<smem>>
    %597 = vector.broadcast %596 : f32 to vector<1x256xf32>
    %598 = arith.mulf %597, %76 : vector<1x256xf32>
    %599 = arith.addf %595, %598 : vector<1x256xf32>
    %c46 = arith.constant 46 : index
    %600 = memref.load %arg6[%c46] : memref<98xf32, #tpu.memory_space<smem>>
    %601 = vector.broadcast %600 : f32 to vector<1x256xf32>
    %602 = arith.mulf %601, %119 : vector<1x256xf32>
    %603 = arith.addf %599, %602 : vector<1x256xf32>
    %c47 = arith.constant 47 : index
    %604 = memref.load %arg6[%c47] : memref<98xf32, #tpu.memory_space<smem>>
    %605 = vector.broadcast %604 : f32 to vector<1x256xf32>
    %606 = arith.mulf %605, %129 : vector<1x256xf32>
    %607 = arith.addf %603, %606 : vector<1x256xf32>
    %c48 = arith.constant 48 : index
    %608 = memref.load %arg6[%c48] : memref<98xf32, #tpu.memory_space<smem>>
    %609 = vector.broadcast %608 : f32 to vector<1x256xf32>
    %610 = arith.mulf %609, %139 : vector<1x256xf32>
    %611 = arith.addf %607, %610 : vector<1x256xf32>
    %c91 = arith.constant 91 : index
    %612 = memref.load %arg6[%c91] : memref<98xf32, #tpu.memory_space<smem>>
    %613 = vector.broadcast %612 : f32 to vector<1x256xf32>
    %614 = arith.mulf %613, %149 : vector<1x256xf32>
    %615 = arith.addf %611, %614 : vector<1x256xf32>
    %c92 = arith.constant 92 : index
    %616 = memref.load %arg6[%c92] : memref<98xf32, #tpu.memory_space<smem>>
    %617 = vector.broadcast %616 : f32 to vector<1x256xf32>
    %618 = arith.mulf %617, %159 : vector<1x256xf32>
    %619 = arith.addf %615, %618 : vector<1x256xf32>
    %c93 = arith.constant 93 : index
    %620 = memref.load %arg6[%c93] : memref<98xf32, #tpu.memory_space<smem>>
    %621 = vector.broadcast %620 : f32 to vector<1x256xf32>
    %622 = arith.mulf %621, %169 : vector<1x256xf32>
    %623 = arith.addf %619, %622 : vector<1x256xf32>
    %c94 = arith.constant 94 : index
    %624 = memref.load %arg6[%c94] : memref<98xf32, #tpu.memory_space<smem>>
    %625 = vector.broadcast %624 : f32 to vector<1x256xf32>
    %626 = arith.mulf %625, %79 : vector<1x256xf32>
    %627 = arith.addf %623, %626 : vector<1x256xf32>
    %c95 = arith.constant 95 : index
    %628 = memref.load %arg6[%c95] : memref<98xf32, #tpu.memory_space<smem>>
    %629 = vector.broadcast %628 : f32 to vector<1x256xf32>
    %630 = arith.mulf %629, %179 : vector<1x256xf32>
    %631 = arith.addf %627, %630 : vector<1x256xf32>
    %c96 = arith.constant 96 : index
    %632 = memref.load %arg6[%c96] : memref<98xf32, #tpu.memory_space<smem>>
    %633 = vector.broadcast %632 : f32 to vector<1x256xf32>
    %634 = arith.mulf %633, %189 : vector<1x256xf32>
    %635 = arith.addf %631, %634 : vector<1x256xf32>
    %c97 = arith.constant 97 : index
    %636 = memref.load %arg6[%c97] : memref<98xf32, #tpu.memory_space<smem>>
    %637 = vector.broadcast %636 : f32 to vector<1x256xf32>
    %638 = arith.mulf %637, %199 : vector<1x256xf32>
    %639 = arith.addf %635, %638 : vector<1x256xf32>
    %c208_i32 = arith.constant 208 : i32
    %640 = tpu.dynamic_rotate %639 by %c208_i32 dim 1 : vector<1x256xf32>, i32 -> vector<1x256xf32>
    %c48_i32_113 = arith.constant 48 : i32
    %641 = vector.broadcast %c48_i32_113 : i32 to vector<1x256xi32>
    %642 = arith.addi %0, %641 : vector<1x256xi32>
    %c0_i32_114 = arith.constant 0 : i32
    %643 = vector.broadcast %c0_i32_114 : i32 to vector<1x256xi32>
    %644 = arith.cmpi sge, %642, %643 : vector<1x256xi32>
    %c256_i32_115 = arith.constant 256 : i32
    %645 = vector.broadcast %c256_i32_115 : i32 to vector<1x256xi32>
    %646 = arith.cmpi slt, %642, %645 : vector<1x256xi32>
    %647 = arith.andi %644, %646 : vector<1x256xi1>
    %cst_116 = arith.constant 0.000000e+00 : f32
    %648 = vector.broadcast %cst_116 : f32 to vector<1x256xf32>
    %649 = arith.select %647, %640, %648 : vector<1x256xi1>, vector<1x256xf32>
    %650 = arith.addf %584, %649 : vector<1x256xf32>
    %c0_117 = arith.constant 0 : index
    %651 = memref.load %arg7[%c0_117] : memref<2xf32, #tpu.memory_space<smem>>
    %652 = vector.broadcast %651 : f32 to vector<1x256xf32>
    %653 = arith.mulf %650, %652 : vector<1x256xf32>
    %c1_118 = arith.constant 1 : index
    %654 = memref.load %arg7[%c1_118] : memref<2xf32, #tpu.memory_space<smem>>
    %655 = vector.broadcast %654 : f32 to vector<1x256xf32>
    %656 = arith.addf %653, %655 : vector<1x256xf32>
    %657 = arith.negf %656 : vector<1x256xf32>
    %658 = math.exp %657 : vector<1x256xf32>
    %cst_119 = arith.constant 1.000000e+00 : f32
    %659 = vector.broadcast %cst_119 : f32 to vector<1x256xf32>
    %660 = arith.addf %659, %658 : vector<1x256xf32>
    %661 = arith.divf %659, %660 : vector<1x256xf32>
    %c0_120 = arith.constant 0 : index
    %c0_121 = arith.constant 0 : index
    %c0_122 = arith.constant 0 : index
    %662 = vector.load %arg1[%c0_120, %c0_121, %c0_122] : memref<1x32x256xf32, #tpu.memory_space<vmem>>, vector<1x32x256xf32>
    %663 = vector.shape_cast %43 : vector<1x32xf32> to vector<1x32x1xf32>
    %664 = vector.broadcast %663 : vector<1x32x1xf32> to vector<1x32x256xf32>
    %665 = arith.mulf %662, %664 : vector<1x32x256xf32>
    %666 = vector.shape_cast %661 : vector<1x256xf32> to vector<1x1x256xf32>
    %667 = vector.broadcast %666 : vector<1x1x256xf32> to vector<1x32x256xf32>
    %668 = arith.mulf %665, %667 : vector<1x32x256xf32>
    %c0_123 = arith.constant 0 : index
    %c0_124 = arith.constant 0 : index
    %c0_125 = arith.constant 0 : index
    %669 = vector.load %arg8[%c0_123, %c0_124, %c0_125] : memref<1x32x256xf32, #tpu.memory_space<vmem>>, vector<1x32x256xf32>
    tpu.vector_store %arg8[%c0_123, %c0_124, %c0_125], %668 {strides = array<i32>} : memref<1x32x256xf32, #tpu.memory_space<vmem>>, vector<1x32x256xf32>,
    return
  }
  func.func @transform_0(%arg0: i32) -> (i32, i32, i32) {
    %c0_i32 = arith.constant 0 : i32
    %c0_i32_0 = arith.constant 0 : i32
    %c0_i32_1 = arith.constant 0 : i32
    return %arg0, %c0_i32, %c0_i32_0 : i32, i32, i32
  }
  func.func @transform_1(%arg0: i32) -> (i32, i32) {
    %c0_i32 = arith.constant 0 : i32
    %c0_i32_0 = arith.constant 0 : i32
    %c0_i32_1 = arith.constant 0 : i32
    return %c0_i32, %c0_i32_0 : i32, i32
  }
  func.func @transform_2(%arg0: i32) -> (i32, i32) {
    %c0_i32 = arith.constant 0 : i32
    %c0_i32_0 = arith.constant 0 : i32
    %c0_i32_1 = arith.constant 0 : i32
    return %c0_i32, %c0_i32_0 : i32, i32
  }
  func.func @transform_3(%arg0: i32) -> (i32, i32) {
    %c0_i32 = arith.constant 0 : i32
    %c0_i32_0 = arith.constant 0 : i32
    %c0_i32_1 = arith.constant 0 : i32
    return %c0_i32, %c0_i32_0 : i32, i32
  }
  func.func @transform_4(%arg0: i32) -> (i32, i32) {
    %c0_i32 = arith.constant 0 : i32
    %c0_i32_0 = arith.constant 0 : i32
    %c0_i32_1 = arith.constant 0 : i32
    return %c0_i32, %c0_i32_0 : i32, i32
  }
  func.func @transform_5(%arg0: i32) -> i32 {
    %c0_i32 = arith.constant 0 : i32
    %c0_i32_0 = arith.constant 0 : i32
    return %c0_i32 : i32
  }
  func.func @transform_6(%arg0: i32) -> i32 {
    %c0_i32 = arith.constant 0 : i32
    %c0_i32_0 = arith.constant 0 : i32
    return %c0_i32 : i32
  }
  func.func @transform_7(%arg0: i32) -> (i32, i32, i32) {
    %c0_i32 = arith.constant 0 : i32
    %c0_i32_0 = arith.constant 0 : i32
    %c0_i32_1 = arith.constant 0 : i32
    return %arg0, %c0_i32, %c0_i32_0 : i32, i32, i32
  }
}

</mosaic_0001>

<llo_original>
// kernel: tpu_custom_call.1
$region0: #{tpu_custom_call.1}
  #allocation0 [shape = 'u32[]', space=smem, size = 0x4, offset = 0x4, fixed_abs, tag = 'smem constant byte address 0x4 - core index']
  #allocation1 [shape = 'u32[72,128]{1,0:T(1,128)}', space=vmem, size = 0x9000, scoped, tag = 'internal scratch']
  %s0 = inlined_call_operand.hbm [shape: f32[2,32,256], index: 0, kind: input, shape index: {}]
  %s1 = inlined_call_operand.vmem [shape: f32[32,2], index: 1, kind: input, shape index: {}]
  %s2 = inlined_call_operand.vmem [shape: f32[1,2], index: 2, kind: input, shape index: {}]
  %s3 = inlined_call_operand.vmem [shape: f32[2,32], index: 3, kind: input, shape index: {}]
  %s4 = inlined_call_operand.vmem [shape: f32[1,32], index: 4, kind: input, shape index: {}]
  %s5 = inlined_call_operand.vmem [shape: f32[98], index: 5, kind: input, shape index: {}]
  %s6 = inlined_call_operand.vmem [shape: f32[2], index: 6, kind: input, shape index: {}]
  %s7 = inlined_call_operand.hbm [shape: f32[2,32,256], index: 7, kind: output, shape index: {}]
  %s8 = sld [smem:[#allocation0]]
  $region73: #{tpu_custom_call.1} parent=0
    _
  %s10 = ssub.s32 1, %s8
  %s11 = scalar_select 0, %s10, %s8
  $region1: #{tpu_custom_call.1} parent=0
    #allocation2 [shape = 'u8[65536]{0}', space=vmem, size = 0x10000, scoped, tag = 'input window, operand 0']
    #allocation3 [shape = 's32[2]{0}', space=sflag, size = 0x8, scoped, tag = 'scoped memory for tpu_custom_call.1']
    #allocation4 [shape = 's32[2]{0}', space=sflag, size = 0x8, scoped, tag = 'scoped memory for tpu_custom_call.1']
    #allocation5 [shape = 's32[2]{0}', space=sflag, size = 0x8, scoped, tag = 'scoped memory for tpu_custom_call.1']
    #allocation6 [shape = 'u8[512]{0}', space=smem, size = 0x200, scoped, tag = 'input window, operand 5, single buffered']
    #allocation7 [shape = 'u8[512]{0}', space=smem, size = 0x200, scoped, tag = 'input window, operand 6, single buffered']
    #allocation8 [shape = 's32[1]{0}', space=sflag, size = 0x4, scoped, tag = 'scoped memory for tpu_custom_call.1']
    #allocation9 [shape = 'u8[65536]{0}', space=vmem, size = 0x10000, scoped, tag = 'output window, operand 0']
    %12 = vsyncpa [#allocation3], 0
    %s13 = scalar_lea.sflag [#allocation3], 1
    %14 = vsyncpa %s13, 0
    %15 = vsyncpa [#allocation5], 0
    %16 = vsyncpa [#allocation8], 0
    %17 = vsyncpa [#allocation4], 0
    %s18 = scalar_lea.sflag [#allocation4], 1
    %19 = vsyncpa %s18, 0
    loop: start=0, step=1, limit=4
    $region2: #{tpu_custom_call.1} parent=1 // loop_pre_header
      _
    $region3: #{tpu_custom_call.1} parent=1 // loop_header
      %s21 = sphi 0, %s25
      %p22 = scmp.ge.s32.totalorder %s21, 4
      %s31 = sphi 0, %s33
      %s34 = sphi 0, %s31
      %s35 = sphi 0, %s34
      %s51 = sphi 0, %s35
      %s55 = sphi 0, %s55
      %s57 = sphi 0, %s55
      %s58 = sphi 0, %s57
      %s72 = sphi 0, %s58
      %s76 = sphi 0, %s76
      %s78 = sphi 0, %s76
      %s79 = sphi 0, %s78
      %s93 = sphi 0, %s79
      %s97 = sphi 0, %s97
      %s99 = sphi 0, %s97
      %s100 = sphi 0, %s99
      %s114 = sphi 0, %s100
      %s118 = sphi 0, %s118
      %s120 = sphi 0, %s118
      %s121 = sphi 0, %s120
      %s135 = sphi 0, %s121
      %s139 = sphi 0, %s139
      %s141 = sphi 0, %s139
      %s142 = sphi 0, %s141
      %s156 = sphi 0, %s142
      %s160 = sphi 0, %s160
      %s162 = sphi 0, %s160
      %s163 = sphi 0, %s162
      %s177 = sphi 0, %s163
      %s183 = sphi 0, %s185
      %s186 = sphi 0, %s183
      %s187 = sphi 0, %s186
      %s203 = sphi 0, %s187
    $region4: #{tpu_custom_call.1} parent=1 // loop_header_branch
      %24 = sbr.rel (%p22) target = $region8
    $region5: #{tpu_custom_call.1} parent=1 // loop_body
      %s26 = ssub.s32 %s21, 1
      %s27 = ssub.s32 %s21, 2
      %s28 = sadd.s32 %s21, 1
      %s29 = ssub.s32 %s21, %s28
      %p30 = scmp.eq.s32.totalorder %s29, 0
      %s32 = sadd.s32 %s31, 1
      %s33 = scalar_select %p30, %s31, %s32
      %p36 = pneg %p30
      %p37 = scmp.eq.s32.totalorder %s21, 1
      %p38 = por %p36, %p37
      %p39 = scmp.ne.s32.totalorder %s31, %s34
      %p40 = scmp.eq.s32.totalorder %s21, 0
      %p41 = por %p39, %p40
      %p42 = scmp.ne.s32.totalorder %s31, %s34
      %p43 = scmp.eq.s32.totalorder %s26, 1
      %p44 = por %p42, %p43
      %p45 = scmp.ne.s32.totalorder %s34, %s35
      %p46 = scmp.eq.s32.totalorder %s26, 0
      %p47 = por %p45, %p46
      %p48 = scmp.ne.s32.totalorder %s34, %s35
      %p49 = scmp.eq.s32.totalorder %s27, 1
      %p50 = por %p48, %p49
      %p52 = scmp.ne.s32.totalorder %s35, %s51
      %p53 = scmp.eq.s32.totalorder %s27, 0
      %p54 = por %p52, %p53
      %s56 = sadd.s32 %s55, 1
      %p59 = scmp.eq.s32.totalorder %s21, 1
      %p60 = scmp.ne.s32.totalorder %s55, %s57
      %p61 = scmp.eq.s32.totalorder %s21, 0
      %p62 = por %p60, %p61
      %p63 = scmp.ne.s32.totalorder %s55, %s57
      %p64 = scmp.eq.s32.totalorder %s26, 1
      %p65 = por %p63, %p64
      %p66 = scmp.ne.s32.totalorder %s57, %s58
      %p67 = scmp.eq.s32.totalorder %s26, 0
      %p68 = por %p66, %p67
      %p69 = scmp.ne.s32.totalorder %s57, %s58
      %p70 = scmp.eq.s32.totalorder %s27, 1
      %p71 = por %p69, %p70
      %p73 = scmp.ne.s32.totalorder %s58, %s72
      %p74 = scmp.eq.s32.totalorder %s27, 0
      %p75 = por %p73, %p74
      %s77 = sadd.s32 %s76, 1
      %p80 = scmp.eq.s32.totalorder %s21, 1
      %p81 = scmp.ne.s32.totalorder %s76, %s78
      %p82 = scmp.eq.s32.totalorder %s21, 0
      %p83 = por %p81, %p82
      %p84 = scmp.ne.s32.totalorder %s76, %s78
      %p85 = scmp.eq.s32.totalorder %s26, 1
      %p86 = por %p84, %p85
      %p87 = scmp.ne.s32.totalorder %s78, %s79
      %p88 = scmp.eq.s32.totalorder %s26, 0
      %p89 = por %p87, %p88
      %p90 = scmp.ne.s32.totalorder %s78, %s79
      %p91 = scmp.eq.s32.totalorder %s27, 1
      %p92 = por %p90, %p91
      %p94 = scmp.ne.s32.totalorder %s79, %s93
      %p95 = scmp.eq.s32.totalorder %s27, 0
      %p96 = por %p94, %p95
      %s98 = sadd.s32 %s97, 1
      %p101 = scmp.eq.s32.totalorder %s21, 1
      %p102 = scmp.ne.s32.totalorder %s97, %s99
      %p103 = scmp.eq.s32.totalorder %s21, 0
      %p104 = por %p102, %p103
      %p105 = scmp.ne.s32.totalorder %s97, %s99
      %p106 = scmp.eq.s32.totalorder %s26, 1
      %p107 = por %p105, %p106
      %p108 = scmp.ne.s32.totalorder %s99, %s100
      %p109 = scmp.eq.s32.totalorder %s26, 0
      %p110 = por %p108, %p109
      %p111 = scmp.ne.s32.totalorder %s99, %s100
      %p112 = scmp.eq.s32.totalorder %s27, 1
      %p113 = por %p111, %p112
      %p115 = scmp.ne.s32.totalorder %s100, %s114
      %p116 = scmp.eq.s32.totalorder %s27, 0
      %p117 = por %p115, %p116
      %s119 = sadd.s32 %s118, 1
      %p122 = scmp.eq.s32.totalorder %s21, 1
      %p123 = scmp.ne.s32.totalorder %s118, %s120
      %p124 = scmp.eq.s32.totalorder %s21, 0
      %p125 = por %p123, %p124
      %p126 = scmp.ne.s32.totalorder %s118, %s120
      %p127 = scmp.eq.s32.totalorder %s26, 1
      %p128 = por %p126, %p127
      %p129 = scmp.ne.s32.totalorder %s120, %s121
      %p130 = scmp.eq.s32.totalorder %s26, 0
      %p131 = por %p129, %p130
      %p132 = scmp.ne.s32.totalorder %s120, %s121
      %p133 = scmp.eq.s32.totalorder %s27, 1
      %p134 = por %p132, %p133
      %p136 = scmp.ne.s32.totalorder %s121, %s135
      %p137 = scmp.eq.s32.totalorder %s27, 0
      %p138 = por %p136, %p137
      %s140 = sadd.s32 %s139, 1
      %p143 = scmp.eq.s32.totalorder %s21, 1
      %p144 = scmp.ne.s32.totalorder %s139, %s141
      %p145 = scmp.eq.s32.totalorder %s21, 0
      %p146 = por %p144, %p145
      %p147 = scmp.ne.s32.totalorder %s139, %s141
      %p148 = scmp.eq.s32.totalorder %s26, 1
      %p149 = por %p147, %p148
      %p150 = scmp.ne.s32.totalorder %s141, %s142
      %p151 = scmp.eq.s32.totalorder %s26, 0
      %p152 = por %p150, %p151
      %p153 = scmp.ne.s32.totalorder %s141, %s142
      %p154 = scmp.eq.s32.totalorder %s27, 1
      %p155 = por %p153, %p154
      %p157 = scmp.ne.s32.totalorder %s142, %s156
      %p158 = scmp.eq.s32.totalorder %s27, 0
      %p159 = por %p157, %p158
      %s161 = sadd.s32 %s160, 1
      %p164 = scmp.eq.s32.totalorder %s21, 1
      %p165 = scmp.ne.s32.totalorder %s160, %s162
      %p166 = scmp.eq.s32.totalorder %s21, 0
      %p167 = por %p165, %p166
      %p168 = scmp.ne.s32.totalorder %s160, %s162
      %p169 = scmp.eq.s32.totalorder %s26, 1
      %p170 = por %p168, %p169
      %p171 = scmp.ne.s32.totalorder %s162, %s163
      %p172 = scmp.eq.s32.totalorder %s26, 0
      %p173 = por %p171, %p172
      %p174 = scmp.ne.s32.totalorder %s162, %s163
      %p175 = scmp.eq.s32.totalorder %s27, 1
      %p176 = por %p174, %p175
      %p178 = scmp.ne.s32.totalorder %s163, %s177
      %p179 = scmp.eq.s32.totalorder %s27, 0
      %p180 = por %p178, %p179
      %s181 = ssub.s32 %s21, %s28
      %p182 = scmp.eq.s32.totalorder %s181, 0
      %s184 = sadd.s32 %s183, 1
      %s185 = scalar_select %p182, %s183, %s184
      %p188 = pneg %p182
      %p189 = scmp.eq.s32.totalorder %s21, 1
      %p190 = por %p188, %p189
      %p191 = scmp.ne.s32.totalorder %s183, %s186
      %p192 = scmp.eq.s32.totalorder %s21, 0
      %p193 = por %p191, %p192
      %p194 = scmp.ne.s32.totalorder %s183, %s186
      %p195 = scmp.eq.s32.totalorder %s26, 1
      %p196 = por %p194, %p195
      %p197 = scmp.ne.s32.totalorder %s186, %s187
      %p198 = scmp.eq.s32.totalorder %s26, 0
      %p199 = por %p197, %p198
      %p200 = scmp.ne.s32.totalorder %s186, %s187
      %p201 = scmp.eq.s32.totalorder %s27, 1
      %p202 = por %p200, %p201
      %p204 = scmp.ne.s32.totalorder %s187, %s203
      %p205 = scmp.eq.s32.totalorder %s27, 0
      %p206 = por %p204, %p205
      %p207 = scmp.le.s32.totalorder 1, %s21
      %p208 = scmp.lt.s32.totalorder %s21, 3
      %p209 = pnand %p207, %p208
      %p210 = pneg %p209
      // Predicated region
      $region9: #{tpu_custom_call.1} parent=5 // pred_check
        _
      $region10: #{tpu_custom_call.1} parent=5 // pred_check_branch
        %212 = sbr.rel (%p209) target = $region12
      $region11: #{tpu_custom_call.1} parent=5 // pred_region
        %s213 = ssub.s32 %s21, 1
        // Predicated region
        $region13: #{tpu_custom_call.1} parent=11 // pred_check
          %p214 = pneg %p68
        $region14: #{tpu_custom_call.1} parent=11 // pred_check_branch
          %216 = sbr.rel (%p214) target = $region16
        $region15: #{tpu_custom_call.1} parent=11 // pred_region
          _
        $region16: #{tpu_custom_call.1} parent=11 // pred_fallthru
          _
        // Predicated region
        $region17: #{tpu_custom_call.1} parent=11 // pred_check
          %p217 = pneg %p89
        $region18: #{tpu_custom_call.1} parent=11 // pred_check_branch
          %219 = sbr.rel (%p217) target = $region20
        $region19: #{tpu_custom_call.1} parent=11 // pred_region
          _
        $region20: #{tpu_custom_call.1} parent=11 // pred_fallthru
          _
        // Predicated region
        $region21: #{tpu_custom_call.1} parent=11 // pred_check
          %p220 = pneg %p110
        $region22: #{tpu_custom_call.1} parent=11 // pred_check_branch
          %222 = sbr.rel (%p220) target = $region24
        $region23: #{tpu_custom_call.1} parent=11 // pred_region
          _
        $region24: #{tpu_custom_call.1} parent=11 // pred_fallthru
          _
        // Predicated region
        $region25: #{tpu_custom_call.1} parent=11 // pred_check
          %p223 = pneg %p131
        $region26: #{tpu_custom_call.1} parent=11 // pred_check_branch
          %225 = sbr.rel (%p223) target = $region28
        $region27: #{tpu_custom_call.1} parent=11 // pred_region
          _
        $region28: #{tpu_custom_call.1} parent=11 // pred_fallthru
          _
        // Predicated region
        $region29: #{tpu_custom_call.1} parent=11 // pred_check
          %p226 = pneg %p152
        $region30: #{tpu_custom_call.1} parent=11 // pred_check_branch
          %228 = sbr.rel (%p226) target = $region32
        $region31: #{tpu_custom_call.1} parent=11 // pred_region
          %230 = vsyncadd [#allocation5], 0
          %s232 = sshll.u32 %s5, 4
          %s233 = int_to_ptr.vmem [resolvable:$true] %s232
          %235 = dma.vmem_to_smem %s233, 16, [#allocation6], [#allocation5]
        $region32: #{tpu_custom_call.1} parent=11 // pred_fallthru
          _
        // Predicated region
        $region33: #{tpu_custom_call.1} parent=11 // pred_check
          %p236 = pneg %p173
        $region34: #{tpu_custom_call.1} parent=11 // pred_check_branch
          %238 = sbr.rel (%p236) target = $region36
        $region35: #{tpu_custom_call.1} parent=11 // pred_region
          %240 = vsyncadd [#allocation8], 0
          %s242 = sshll.u32 %s6, 4
          %s243 = int_to_ptr.vmem [resolvable:$true] %s242
          %245 = dma.vmem_to_smem %s243, 16, [#allocation7], [#allocation8]
        $region36: #{tpu_custom_call.1} parent=11 // pred_fallthru
          _
      $region12: #{tpu_custom_call.1} parent=5 // pred_fallthru
        _
      %p246 = scmp.lt.s32.totalorder %s21, 2
      // Predicated region
      $region37: #{tpu_custom_call.1} parent=5 // pred_check
        %p247 = pneg %p246
      $region38: #{tpu_custom_call.1} parent=5 // pred_check_branch
        %249 = sbr.rel (%p247) target = $region40
      $region39: #{tpu_custom_call.1} parent=5 // pred_region
        // Predicated region
        $region41: #{tpu_custom_call.1} parent=39 // pred_check
          %p250 = pneg %p41
        $region42: #{tpu_custom_call.1} parent=39 // pred_check_branch
          %252 = sbr.rel (%p250) target = $region44
        $region43: #{tpu_custom_call.1} parent=39 // pred_region
          %s253 = sand.u32 %s31, 1
          %s254 = scalar_lea.sflag [#allocation3], %s253
          %s255 = sand.u32 %s31, 1
          %s256 = smul.addr %s255, 64
          %s257 = scalar_lea.vmem [#allocation2], %s256
          %259 = vsyncadd %s254, 0
          %s260 = smul.addr %s21, 8
          %s261 = smul.addr %s260, 8
          %s262 = scalar_lea.hbm %s0, %s261
          %s263 = sshll.u32 %s262, 4
          %s264 = int_to_ptr.hbm [resolvable:$true] %s263
          %s265 = sshll.u32 %s257, 4
          %s266 = int_to_ptr.vmem [resolvable:$true] %s265
          %271 = dma.hbm_to_vmem [thread:$0]  %s264, 1024, %s266, %s254, 256, 256, 16
        $region44: #{tpu_custom_call.1} parent=39 // pred_fallthru
          _
      $region40: #{tpu_custom_call.1} parent=5 // pred_fallthru
        _
      %p272 = scmp.le.s32.totalorder 1, %s21
      %p273 = scmp.lt.s32.totalorder %s21, 3
      %p274 = pnand %p272, %p273
      %p275 = pneg %p274
      // Predicated region
      $region45: #{tpu_custom_call.1} parent=5 // pred_check
        _
      $region46: #{tpu_custom_call.1} parent=5 // pred_check_branch
        %277 = sbr.rel (%p274) target = $region48
      $region47: #{tpu_custom_call.1} parent=5 // pred_region
        %s278 = ssub.s32 %s21, 1
        %s279 = sand.u32 %s34, 1
        %s280 = scalar_lea.sflag [#allocation3], %s279
        %s281 = sand.u32 %s34, 1
        %s282 = smul.addr %s281, 64
        %s283 = scalar_lea.vmem [#allocation2], %s282
        // Predicated region
        $region49: #{tpu_custom_call.1} parent=47 // pred_check
          %p284 = pneg %p47
        $region50: #{tpu_custom_call.1} parent=47 // pred_check_branch
          %286 = sbr.rel (%p284) target = $region52
        $region51: #{tpu_custom_call.1} parent=47 // pred_region
          %288 = dma.done %s280, 1024
        $region52: #{tpu_custom_call.1} parent=47 // pred_fallthru
          _
        // Predicated region
        $region53: #{tpu_custom_call.1} parent=47 // pred_check
          %p289 = pneg %p152
        $region54: #{tpu_custom_call.1} parent=47 // pred_check_branch
          %291 = sbr.rel (%p289) target = $region56
        $region55: #{tpu_custom_call.1} parent=47 // pred_region
          %293 = dma.done [#allocation5], 16
        $region56: #{tpu_custom_call.1} parent=47 // pred_fallthru
          _
        // Predicated region
        $region57: #{tpu_custom_call.1} parent=47 // pred_check
          %p294 = pneg %p173
        $region58: #{tpu_custom_call.1} parent=47 // pred_check_branch
          %296 = sbr.rel (%p294) target = $region60
        $region59: #{tpu_custom_call.1} parent=47 // pred_region
          %298 = dma.done [#allocation8], 16
        $region60: #{tpu_custom_call.1} parent=47 // pred_fallthru
          _
        %299 = sfence
        %s300 = sand.u32 %s34, 1
        %s301 = scalar_lea.sflag [#allocation3], %s300
        %s302 = sand.u32 %s34, 1
        %s303 = smul.addr %s302, 64
        %s304 = scalar_lea.vmem [#allocation2], %s303
        %p305 = pneg %p47
        %p306 = pneg %p44
        %p307 = pneg %p68
        %p308 = pneg %p65
        %p309 = pneg %p89
        %p310 = pneg %p86
        %p311 = pneg %p110
        %p312 = pneg %p107
        %p313 = pneg %p131
        %p314 = pneg %p128
        %p315 = pneg %p152
        %p316 = pneg %p149
        %p317 = pneg %p173
        %p318 = pneg %p170
        %p319 = pneg %p199
        %p320 = pneg %p196
        %s321 = sand.u32 %s186, 1
        %s322 = scalar_lea.sflag [#allocation4], %s321
        %s323 = sand.u32 %s186, 1
        %s324 = smul.addr %s323, 64
        %s325 = scalar_lea.vmem [#allocation9], %s324
        %v326 = vlaneseq
        %v327 = vand.u32 %v326, 127
        %v328 = vadd.s32 %v327, 128
        %vm329 = vcmp.lt.s32.totalorder %v327, 0
        %v330 = vsub.s32 0, %v327
        %v331 = vsel %vm329, %v330, %v327
        %v332 = vshrl.u32 %v331, 4
        %v333 = vand.u32 %v331, 15
        %v334 = vsub.s32 0, %v333
        %v335 = vsel %vm329, %v334, %v333
        %vm336 = vcmp.lt.s32.totalorder %v328, 0
        %v337 = vsub.s32 0, %v328
        %v338 = vsel %vm336, %v337, %v328
        %v339 = vshrl.u32 %v338, 4
        %v340 = vand.u32 %v338, 15
        %v341 = vsub.s32 0, %v340
        %v342 = vsel %vm336, %v341, %v340
        %vm343 = vcmp.ne.s32.totalorder %v335, 0
        %vm344 = vcmp.ne.s32.totalorder %v342, 0
        %vm345 = vcmp.lt.s32.totalorder %v335, 0
        %vm346 = vcmp.lt.s32.totalorder %v342, 0
        %vm347 = vmand %vm345, %vm343
        %vm348 = vmand %vm346, %vm344
        %v349 = vadd.s32 %v335, 16
        %v350 = vadd.s32 %v342, 16
        %v351 = vsel %vm347, %v349, %v335
        %v352 = vsel %vm348, %v350, %v342
        %v353 = vld [vmem:[%s283] sm:$0xff]
        %v354 = vld [vmem:[%s283 + $0x8] sm:$0xff]
        %v355 = vld [vmem:[%s283 + $0x10] sm:$0xff]
        %v356 = vld [vmem:[%s283 + $0x18] sm:$0xff]
        %v357 = vld [vmem:[%s283 + $0x20] sm:$0xff]
        %v358 = vld [vmem:[%s283 + $0x28] sm:$0xff]
        %v359 = vld [vmem:[%s283 + $0x30] sm:$0xff]
        %v360 = vld [vmem:[%s283 + $0x38] sm:$0xff]
        %v361 = vadd.f32 %v353, %v354
        %362 = vadd.xlane.f32.xlu0 %v361
        %v363 = vpop.xlane.xlu0 %362
        %v364 = vadd.f32 %v355, %v356
        %365 = vadd.xlane.f32.xlu0 %v364
        %v366 = vpop.xlane.xlu0 %365
        %v367 = vadd.f32 %v357, %v358
        %368 = vadd.xlane.f32.xlu0 %v367
        %v369 = vpop.xlane.xlu0 %368
        %v370 = vadd.f32 %v359, %v360
        %371 = vadd.xlane.f32.xlu0 %v370
        %v372 = vpop.xlane.xlu0 %371
        %v373 = vmax.f32 %v353, %v354
        %374 = vmax.xlane.f32.xlu0 %v373
        %v375 = vpop.xlane.xlu0 %374
        %v376 = vmax.f32 %v355, %v356
        %377 = vmax.xlane.f32.xlu0 %v376
        %v378 = vpop.xlane.xlu0 %377
        %v379 = vmax.f32 %v357, %v358
        %380 = vmax.xlane.f32.xlu0 %v379
        %v381 = vpop.xlane.xlu0 %380
        %v382 = vmax.f32 %v359, %v360
        %383 = vmax.xlane.f32.xlu0 %v382
        %v384 = vpop.xlane.xlu0 %383
        %v385 = vmul.f32 %v363, 0.00390625
        %v386 = vmul.f32 %v366, 0.00390625
        %v387 = vmul.f32 %v369, 0.00390625
        %v388 = vmul.f32 %v372, 0.00390625
        %v393 = vperm.slane %v385, %v327
        %v394 = vadd.s32 %v327, 4294967288
        %v395 = vperm.slane %v386, %v394
        %vm396 = vcmask 130112
        %v397 = vsel %vm396, %v395, %v393
        %v398 = vadd.s32 %v327, 4294967280
        %v399 = vperm.slane %v387, %v398
        %vm400 = vcmask 195712
        %v401 = vsel %vm400, %v399, %v397
        %v402 = vadd.s32 %v327, 4294967272
        %v403 = vperm.slane %v388, %v402
        %vm404 = vcmask 261312
        %v405 = vsel %vm404, %v403, %v401
        %v411 = vperm.slane %v375, %v327
        %v412 = vperm.slane %v378, %v394
        %v413 = vsel %vm396, %v412, %v411
        %v414 = vperm.slane %v381, %v398
        %v415 = vsel %vm400, %v414, %v413
        %v416 = vperm.slane %v384, %v402
        %v417 = vsel %vm404, %v416, %v415
        %vm419 = vcmask 1040384
        %v420 = vsel %vm419, %v405, %v417
        %v421 = vld [vmem:[%s1] sm:$0xff]
        %v422 = vld [vmem:[%s1 + $0x8] sm:$0xff]
        %v423 = vld [vmem:[%s1 + $0x10] sm:$0xff]
        %v424 = vld [vmem:[%s1 + $0x18] sm:$0xff]
        %v425 = vld [vmem:[%s2] sm:$0x1]
        %v427 = vperm.slane %v425, 0
        %vm429 = vcmask 261120
        %v431 = vsel %vm429, %v420, 0
        %433 = vmatpush.msra.mxu0 0.0
        %434 = vmatpush.msra.mxu0 0.0
        %435 = vmatpush.msra.mxu0 0.0
        %436 = vmatpush.msra.mxu0 0.0
        %437 = vmatpush.msra.mxu0 0.0
        %438 = vmatpush.msra.mxu0 0.0
        %439 = vmatpush.msra.mxu0 0.0
        %440 = vmatpush.msra.mxu0 0.0
        %441 = vmatpush.msra.mxu0 0.0
        %442 = vmatpush.msra.mxu0 0.0
        %443 = vmatpush.msra.mxu0 0.0
        %444 = vmatpush.msra.mxu0 0.0
        %445 = vmatpush.msra.mxu0 %v424
        %446 = vmatpush.msra.mxu0 %v423
        %447 = vmatpush.msra.mxu0 %v422
        %448 = vmatpush.msra.mxu0 %v421
        %449 = vmatmul.f32.gmra.mxu0 %v431
        %v450 = vpop.f32.mrf.mxu0
        %v451 = vadd.f32 %v427, %v450
        %452 = vdwg.mxu0
        %v453 = vmax.f32 %v451, 0.0
        %v454 = vld [vmem:[%s3] sm:$0x3]
        %v455 = vld [vmem:[%s4] sm:$0x1]
        %v457 = vperm.slane %v455, 0
        %vm459 = vcmask 15360
        %v461 = vsel %vm459, %v453, 0
        %vm463 = vcmask 1041408
        %v465 = vsel %vm463, %v454, 0
        %467 = vmatpush.msra.mxu0 0.0
        %468 = vmatpush.msra.mxu0 0.0
        %469 = vmatpush.msra.mxu0 0.0
        %470 = vmatpush.msra.mxu0 0.0
        %471 = vmatpush.msra.mxu0 0.0
        %472 = vmatpush.msra.mxu0 0.0
        %473 = vmatpush.msra.mxu0 0.0
        %474 = vmatpush.msra.mxu0 0.0
        %475 = vmatpush.msra.mxu0 0.0
        %476 = vmatpush.msra.mxu0 0.0
        %477 = vmatpush.msra.mxu0 0.0
        %478 = vmatpush.msra.mxu0 0.0
        %479 = vmatpush.msra.mxu0 0.0
        %480 = vmatpush.msra.mxu0 0.0
        %481 = vmatpush.msra.mxu0 0.0
        %482 = vmatpush.msra.mxu0 %v465
        %483 = vmatmul.f32.gmra.mxu0 %v461
        %v484 = vpop.f32.mrf.mxu0
        %v485 = vadd.f32 %v457, %v484
        %486 = vdwg.mxu0
        %v488 = vrot.slane %v485, 1
        %v490 = vadd.f32 %v485, %v488
        %v491 = vxor.u32 %v490, 2147483648
        %v492 = vmul.f32 %v491, 1.442695
        %v493 = vpow.pop %v492
        %v494 = vadd.f32 %v493, 1.0
        %v495 = vrcp.pop %v494
        %v496 = vmul.f32 %v494, %v495
        %v497 = vsub.f32 1.0, %v496
        %v498 = vmul.f32 %v495, %v497
        %v499 = vadd.f32 %v495, %v498
        %vm500 = vweird.f32 %v494
        %vm501 = vweird.f32 %v495
        %vm502 = vmor %vm500, %vm501
        %v503 = vsel %vm502, %v495, %v499
        %v504 = vand.u32 2147483647, %v494
        %vm505 = vcmp.eq.f32.partialorder %v504, 8.507059e+37
        %v506 = vand.u32 %v494, 2147483648
        %v507 = vor.u32 1.1754944e-38, %v506
        %v508 = vsel %vm505, %v507, %v503
        %v509 = vmul.f32 1.0, %v508
        %v510 = vld [vmem:[%s283] sm:$0xff]
        %v511 = vld [vmem:[%s283 + $0x8] sm:$0xff]
        %v512 = vperm.slane %v509, 0
        %v513 = vlaneseq
        %v514 = vshrl.u32 %v513, 7
        %516 = vset.pattern.permute.xlu0 %v514
        %517 = vperm.xlu0 %516, %v512
        %v518 = vpop.permute.xlu0 %517
        %v519 = vmul.f32 %v510, %v518
        %v520 = vmul.f32 %v511, %v518
        %v521 = vrot.slane %v519, 4
        %v522 = vmax.f32 %v519, %v521
        %v523 = vrot.slane %v522, 2
        %v524 = vmax.f32 %v522, %v523
        %v525 = vrot.slane %v524, 1
        %v526 = vmax.f32 %v524, %v525
        %v527 = vrot.slane %v520, 4
        %v528 = vmax.f32 %v520, %v527
        %v529 = vrot.slane %v528, 2
        %v530 = vmax.f32 %v528, %v529
        %v531 = vrot.slane %v530, 1
        %v532 = vmax.f32 %v530, %v531
        %v533 = vrot.slane %v519, 4
        %v534 = vadd.f32 %v519, %v533
        %v535 = vrot.slane %v534, 2
        %v536 = vadd.f32 %v534, %v535
        %v537 = vrot.slane %v536, 1
        %v538 = vadd.f32 %v536, %v537
        %v539 = vrot.slane %v520, 4
        %v540 = vadd.f32 %v520, %v539
        %v541 = vrot.slane %v540, 2
        %v542 = vadd.f32 %v540, %v541
        %v543 = vrot.slane %v542, 1
        %v544 = vadd.f32 %v542, %v543
        %v545 = vld [vmem:[%s283 + $0x10] sm:$0xff]
        %v546 = vld [vmem:[%s283 + $0x18] sm:$0xff]
        %v547 = vlaneseq
        %v548 = vshrl.u32 %v547, 7
        %v549 = vadd.s32 %v548, 8
        %550 = vset.pattern.permute.xlu0 %v549
        %551 = vperm.xlu0 %550, %v512
        %v552 = vpop.permute.xlu0 %551
        %v553 = vmul.f32 %v545, %v552
        %v554 = vmul.f32 %v546, %v552
        %v555 = vrot.slane %v553, 4
        %v556 = vmax.f32 %v553, %v555
        %v557 = vrot.slane %v556, 2
        %v558 = vmax.f32 %v556, %v557
        %v559 = vrot.slane %v558, 1
        %v560 = vmax.f32 %v558, %v559
        %v561 = vrot.slane %v554, 4
        %v562 = vmax.f32 %v554, %v561
        %v563 = vrot.slane %v562, 2
        %v564 = vmax.f32 %v562, %v563
        %v565 = vrot.slane %v564, 1
        %v566 = vmax.f32 %v564, %v565
        %v567 = vrot.slane %v553, 4
        %v568 = vadd.f32 %v553, %v567
        %v569 = vrot.slane %v568, 2
        %v570 = vadd.f32 %v568, %v569
        %v571 = vrot.slane %v570, 1
        %v572 = vadd.f32 %v570, %v571
        %v573 = vrot.slane %v554, 4
        %v574 = vadd.f32 %v554, %v573
        %v575 = vrot.slane %v574, 2
        %v576 = vadd.f32 %v574, %v575
        %v577 = vrot.slane %v576, 1
        %v578 = vadd.f32 %v576, %v577
        %v579 = vmax.f32 %v526, %v560
        %v580 = vmax.f32 %v532, %v566
        %v581 = vadd.f32 %v538, %v572
        %v582 = vadd.f32 %v544, %v578
        %v583 = vld [vmem:[%s283 + $0x20] sm:$0xff]
        %v584 = vld [vmem:[%s283 + $0x28] sm:$0xff]
        %v585 = vlaneseq
        %v586 = vshrl.u32 %v585, 7
        %v587 = vadd.s32 %v586, 16
        %588 = vset.pattern.permute.xlu0 %v587
        %589 = vperm.xlu0 %588, %v512
        %v590 = vpop.permute.xlu0 %589
        %v591 = vmul.f32 %v583, %v590
        %v592 = vmul.f32 %v584, %v590
        %v593 = vrot.slane %v591, 4
        %v594 = vmax.f32 %v591, %v593
        %v595 = vrot.slane %v594, 2
        %v596 = vmax.f32 %v594, %v595
        %v597 = vrot.slane %v596, 1
        %v598 = vmax.f32 %v596, %v597
        %v599 = vrot.slane %v592, 4
        %v600 = vmax.f32 %v592, %v599
        %v601 = vrot.slane %v600, 2
        %v602 = vmax.f32 %v600, %v601
        %v603 = vrot.slane %v602, 1
        %v604 = vmax.f32 %v602, %v603
        %v605 = vrot.slane %v591, 4
        %v606 = vadd.f32 %v591, %v605
        %v607 = vrot.slane %v606, 2
        %v608 = vadd.f32 %v606, %v607
        %v609 = vrot.slane %v608, 1
        %v610 = vadd.f32 %v608, %v609
        %v611 = vrot.slane %v592, 4
        %v612 = vadd.f32 %v592, %v611
        %v613 = vrot.slane %v612, 2
        %v614 = vadd.f32 %v612, %v613
        %v615 = vrot.slane %v614, 1
        %v616 = vadd.f32 %v614, %v615
        %v617 = vmax.f32 %v579, %v598
        %v618 = vmax.f32 %v580, %v604
        %v619 = vadd.f32 %v581, %v610
        %v620 = vadd.f32 %v582, %v616
        %v621 = vlaneseq
        %v622 = vshrl.u32 %v621, 7
        %v623 = vadd.s32 %v622, 24
        %624 = vset.pattern.permute.xlu0 %v623
        %625 = vperm.xlu0 %624, %v512
        %v626 = vpop.permute.xlu0 %625
        %v627 = vmul.f32 %v359, %v626
        %v628 = vmul.f32 %v360, %v626
        %v629 = vrot.slane %v627, 4
        %v630 = vmax.f32 %v627, %v629
        %v631 = vrot.slane %v630, 2
        %v632 = vmax.f32 %v630, %v631
        %v633 = vrot.slane %v632, 1
        %v634 = vmax.f32 %v632, %v633
        %v635 = vrot.slane %v628, 4
        %v636 = vmax.f32 %v628, %v635
        %v637 = vrot.slane %v636, 2
        %v638 = vmax.f32 %v636, %v637
        %v639 = vrot.slane %v638, 1
        %v640 = vmax.f32 %v638, %v639
        %v641 = vrot.slane %v627, 4
        %v642 = vadd.f32 %v627, %v641
        %v643 = vrot.slane %v642, 2
        %v644 = vadd.f32 %v642, %v643
        %v645 = vrot.slane %v644, 1
        %v646 = vadd.f32 %v644, %v645
        %v647 = vrot.slane %v628, 4
        %v648 = vadd.f32 %v628, %v647
        %v649 = vrot.slane %v648, 2
        %v650 = vadd.f32 %v648, %v649
        %v651 = vrot.slane %v650, 1
        %v652 = vadd.f32 %v650, %v651
        %v653 = vmax.f32 %v617, %v634
        %v654 = vmax.f32 %v618, %v640
        %v655 = vadd.f32 %v619, %v646
        %v656 = vadd.f32 %v620, %v652
        %v657 = vmul.f32 %v655, 0.03125
        %v658 = vmul.f32 %v656, 0.03125
        %659 = vrot.lane.b32.xlu0 %v653, 3
        %v660 = vpop.permute.xlu0 %659
        %661 = vrot.lane.b32.xlu0 %v654, 3
        %v662 = vpop.permute.xlu0 %661
        %vm663 = vcmp.lt.s32.totalorder %v327, 3
        %v664 = vsel %vm663, %v660, %v662
        %v665 = vsel %vm663, %v662, %v660
        %v666 = vadd.s32 %v351, 4294967293
        %v667 = vadd.s32 %v352, 4294967293
        %vm668 = vcmp.ge.s32.totalorder %v666, 0
        %vm669 = vcmp.ge.s32.totalorder %v667, 0
        %vm670 = vcmp.lt.s32.totalorder %v666, 16
        %vm671 = vcmp.lt.s32.totalorder %v667, 16
        %vm672 = vmand %vm668, %vm670
        %vm673 = vmand %vm669, %vm671
        %v674 = vsel %vm672, %v665, 0.0
        %v675 = vsel %vm673, %v664, 0.0
        %676 = vrot.lane.b32.xlu0 %v653, 2
        %v677 = vpop.permute.xlu0 %676
        %678 = vrot.lane.b32.xlu0 %v654, 2
        %v679 = vpop.permute.xlu0 %678
        %vm680 = vcmp.lt.s32.totalorder %v327, 2
        %v681 = vsel %vm680, %v677, %v679
        %v682 = vsel %vm680, %v679, %v677
        %v683 = vadd.s32 %v351, 4294967294
        %v684 = vadd.s32 %v352, 4294967294
        %vm685 = vcmp.ge.s32.totalorder %v683, 0
        %vm686 = vcmp.ge.s32.totalorder %v684, 0
        %vm687 = vcmp.lt.s32.totalorder %v683, 16
        %vm688 = vcmp.lt.s32.totalorder %v684, 16
        %vm689 = vmand %vm685, %vm687
        %vm690 = vmand %vm686, %vm688
        %v691 = vsel %vm689, %v682, 0.0
        %v692 = vsel %vm690, %v681, 0.0
        %693 = vrot.lane.b32.xlu0 %v653, 1
        %v694 = vpop.permute.xlu0 %693
        %695 = vrot.lane.b32.xlu0 %v654, 1
        %v696 = vpop.permute.xlu0 %695
        %vm697 = vcmp.lt.s32.totalorder %v327, 1
        %v698 = vsel %vm697, %v694, %v696
        %v699 = vsel %vm697, %v696, %v694
        %v700 = vadd.s32 %v351, 4294967295
        %v701 = vadd.s32 %v352, 4294967295
        %vm702 = vcmp.ge.s32.totalorder %v700, 0
        %vm703 = vcmp.ge.s32.totalorder %v701, 0
        %vm704 = vcmp.lt.s32.totalorder %v700, 16
        %vm705 = vcmp.lt.s32.totalorder %v701, 16
        %vm706 = vmand %vm702, %vm704
        %vm707 = vmand %vm703, %vm705
        %v708 = vsel %vm706, %v699, 0.0
        %v709 = vsel %vm707, %v698, 0.0
        %710 = vrot.lane.b32.xlu0 %v653, 127
        %v711 = vpop.permute.xlu0 %710
        %712 = vrot.lane.b32.xlu0 %v654, 127
        %v713 = vpop.permute.xlu0 %712
        %vm714 = vcmp.lt.s32.totalorder %v327, 127
        %v715 = vsel %vm714, %v711, %v713
        %v716 = vsel %vm714, %v713, %v711
        %v717 = vadd.s32 %v351, 1
        %v718 = vadd.s32 %v352, 1
        %vm719 = vcmp.ge.s32.totalorder %v717, 0
        %vm720 = vcmp.ge.s32.totalorder %v718, 0
        %vm721 = vcmp.lt.s32.totalorder %v717, 16
        %vm722 = vcmp.lt.s32.totalorder %v718, 16
        %vm723 = vmand %vm719, %vm721
        %vm724 = vmand %vm720, %vm722
        %v725 = vsel %vm723, %v715, 0.0
        %v726 = vsel %vm724, %v716, 0.0
        %727 = vrot.lane.b32.xlu0 %v653, 126
        %v728 = vpop.permute.xlu0 %727
        %729 = vrot.lane.b32.xlu0 %v654, 126
        %v730 = vpop.permute.xlu0 %729
        %vm731 = vcmp.lt.s32.totalorder %v327, 126
        %v732 = vsel %vm731, %v728, %v730
        %v733 = vsel %vm731, %v730, %v728
        %v734 = vadd.s32 %v351, 2
        %v735 = vadd.s32 %v352, 2
        %vm736 = vcmp.ge.s32.totalorder %v734, 0
        %vm737 = vcmp.ge.s32.totalorder %v735, 0
        %vm738 = vcmp.lt.s32.totalorder %v734, 16
        %vm739 = vcmp.lt.s32.totalorder %v735, 16
        %vm740 = vmand %vm736, %vm738
        %vm741 = vmand %vm737, %vm739
        %v742 = vsel %vm740, %v732, 0.0
        %v743 = vsel %vm741, %v733, 0.0
        %744 = vrot.lane.b32.xlu0 %v653, 125
        %v745 = vpop.permute.xlu0 %744
        %746 = vrot.lane.b32.xlu0 %v654, 125
        %v747 = vpop.permute.xlu0 %746
        %vm748 = vcmp.lt.s32.totalorder %v327, 125
        %v749 = vsel %vm748, %v745, %v747
        %v750 = vsel %vm748, %v747, %v745
        %v751 = vadd.s32 %v351, 3
        %v752 = vadd.s32 %v352, 3
        %vm753 = vcmp.ge.s32.totalorder %v751, 0
        %vm754 = vcmp.ge.s32.totalorder %v752, 0
        %vm755 = vcmp.lt.s32.totalorder %v751, 16
        %vm756 = vcmp.lt.s32.totalorder %v752, 16
        %vm757 = vmand %vm753, %vm755
        %vm758 = vmand %vm754, %vm756
        %v759 = vsel %vm757, %v749, 0.0
        %v760 = vsel %vm758, %v750, 0.0
        %761 = vrot.lane.b32.xlu0 %v657, 3
        %v762 = vpop.permute.xlu0 %761
        %763 = vrot.lane.b32.xlu0 %v658, 3
        %v764 = vpop.permute.xlu0 %763
        %v765 = vsel %vm663, %v762, %v764
        %v766 = vsel %vm663, %v764, %v762
        %v767 = vsel %vm672, %v766, 0.0
        %v768 = vsel %vm673, %v765, 0.0
        %769 = vrot.lane.b32.xlu0 %v657, 2
        %v770 = vpop.permute.xlu0 %769
        %771 = vrot.lane.b32.xlu0 %v658, 2
        %v772 = vpop.permute.xlu0 %771
        %v773 = vsel %vm680, %v770, %v772
        %v774 = vsel %vm680, %v772, %v770
        %v775 = vsel %vm689, %v774, 0.0
        %v776 = vsel %vm690, %v773, 0.0
        %777 = vrot.lane.b32.xlu0 %v657, 1
        %v778 = vpop.permute.xlu0 %777
        %779 = vrot.lane.b32.xlu0 %v658, 1
        %v780 = vpop.permute.xlu0 %779
        %v781 = vsel %vm697, %v778, %v780
        %v782 = vsel %vm697, %v780, %v778
        %v783 = vsel %vm706, %v782, 0.0
        %v784 = vsel %vm707, %v781, 0.0
        %785 = vrot.lane.b32.xlu0 %v657, 127
        %v786 = vpop.permute.xlu0 %785
        %787 = vrot.lane.b32.xlu0 %v658, 127
        %v788 = vpop.permute.xlu0 %787
        %v789 = vsel %vm714, %v786, %v788
        %v790 = vsel %vm714, %v788, %v786
        %v791 = vsel %vm723, %v789, 0.0
        %v792 = vsel %vm724, %v790, 0.0
        %793 = vrot.lane.b32.xlu0 %v657, 126
        %v794 = vpop.permute.xlu0 %793
        %795 = vrot.lane.b32.xlu0 %v658, 126
        %v796 = vpop.permute.xlu0 %795
        %v797 = vsel %vm731, %v794, %v796
        %v798 = vsel %vm731, %v796, %v794
        %v799 = vsel %vm740, %v797, 0.0
        %v800 = vsel %vm741, %v798, 0.0
        %801 = vrot.lane.b32.xlu0 %v657, 125
        %v802 = vpop.permute.xlu0 %801
        %803 = vrot.lane.b32.xlu0 %v658, 125
        %v804 = vpop.permute.xlu0 %803
        %v805 = vsel %vm748, %v802, %v804
        %v806 = vsel %vm748, %v804, %v802
        %v807 = vsel %vm757, %v805, 0.0
        %v808 = vsel %vm758, %v806, 0.0
        %s809 = sld [smem:[#allocation6]]
        %v810 = vstv %s809
        %v811 = vmul.f32 %v810, %v674
        %v812 = vmul.f32 %v810, %v675
        %s813 = sld [smem:[#allocation6 + $0x1]]
        %v814 = vstv %s813
        %v815 = vmul.f32 %v814, %v691
        %v816 = vmul.f32 %v814, %v692
        %v817 = vadd.f32 %v811, %v815
        %v818 = vadd.f32 %v812, %v816
        %s819 = sld [smem:[#allocation6 + $0x2]]
        %v820 = vstv %s819
        %v821 = vmul.f32 %v820, %v708
        %v822 = vmul.f32 %v820, %v709
        %v823 = vadd.f32 %v817, %v821
        %v824 = vadd.f32 %v818, %v822
        %s825 = sld [smem:[#allocation6 + $0x3]]
        %v826 = vstv %s825
        %v827 = vmul.f32 %v826, %v653
        %v828 = vmul.f32 %v826, %v654
        %v829 = vadd.f32 %v823, %v827
        %v830 = vadd.f32 %v824, %v828
        %s831 = sld [smem:[#allocation6 + $0x4]]
        %v832 = vstv %s831
        %v833 = vmul.f32 %v832, %v725
        %v834 = vmul.f32 %v832, %v726
        %v835 = vadd.f32 %v829, %v833
        %v836 = vadd.f32 %v830, %v834
        %s837 = sld [smem:[#allocation6 + $0x5]]
        %v838 = vstv %s837
        %v839 = vmul.f32 %v838, %v742
        %v840 = vmul.f32 %v838, %v743
        %v841 = vadd.f32 %v835, %v839
        %v842 = vadd.f32 %v836, %v840
        %s843 = sld [smem:[#allocation6 + $0x6]]
        %v844 = vstv %s843
        %v845 = vmul.f32 %v844, %v759
        %v846 = vmul.f32 %v844, %v760
        %v847 = vadd.f32 %v841, %v845
        %v848 = vadd.f32 %v842, %v846
        %s849 = sld [smem:[#allocation6 + $0x31]]
        %v850 = vstv %s849
        %v851 = vmul.f32 %v850, %v767
        %v852 = vmul.f32 %v850, %v768
        %v853 = vadd.f32 %v847, %v851
        %v854 = vadd.f32 %v848, %v852
        %s855 = sld [smem:[#allocation6 + $0x32]]
        %v856 = vstv %s855
        %v857 = vmul.f32 %v856, %v775
        %v858 = vmul.f32 %v856, %v776
        %v859 = vadd.f32 %v853, %v857
        %v860 = vadd.f32 %v854, %v858
        %s861 = sld [smem:[#allocation6 + $0x33]]
        %v862 = vstv %s861
        %v863 = vmul.f32 %v862, %v783
        %v864 = vmul.f32 %v862, %v784
        %v865 = vadd.f32 %v859, %v863
        %v866 = vadd.f32 %v860, %v864
        %s867 = sld [smem:[#allocation6 + $0x34]]
        %v868 = vstv %s867
        %v869 = vmul.f32 %v868, %v657
        %v870 = vmul.f32 %v868, %v658
        %v871 = vadd.f32 %v865, %v869
        %v872 = vadd.f32 %v866, %v870
        %s873 = sld [smem:[#allocation6 + $0x35]]
        %v874 = vstv %s873
        %v875 = vmul.f32 %v874, %v791
        %v876 = vmul.f32 %v874, %v792
        %v877 = vadd.f32 %v871, %v875
        %v878 = vadd.f32 %v872, %v876
        %s879 = sld [smem:[#allocation6 + $0x36]]
        %v880 = vstv %s879
        %v881 = vmul.f32 %v880, %v799
        %v882 = vmul.f32 %v880, %v800
        %v883 = vadd.f32 %v877, %v881
        %v884 = vadd.f32 %v878, %v882
        %s885 = sld [smem:[#allocation6 + $0x37]]
        %v886 = vstv %s885
        %v887 = vmul.f32 %v886, %v807
        %v888 = vmul.f32 %v886, %v808
        %v889 = vadd.f32 %v883, %v887
        %v890 = vadd.f32 %v884, %v888
        %891 = vrot.lane.b32.xlu0 %v889, 48
        %v892 = vpop.permute.xlu0 %891
        %893 = vrot.lane.b32.xlu0 %v890, 48
        %v894 = vpop.permute.xlu0 %893
        %vm895 = vcmp.lt.s32.totalorder %v327, 48
        %v896 = vsel %vm895, %v892, %v894
        %v897 = vsel %vm895, %v894, %v892
        %v898 = vadd.s32 %v327, 4294967248
        %v899 = vadd.s32 %v328, 4294967248
        %vm900 = vcmp.ge.s32.totalorder %v898, 0
        %vm901 = vcmp.ge.s32.totalorder %v899, 0
        %vm902 = vcmp.lt.s32.totalorder %v898, 256
        %vm903 = vcmp.lt.s32.totalorder %v899, 256
        %vm904 = vmand %vm900, %vm902
        %vm905 = vmand %vm901, %vm903
        %v906 = vsel %vm904, %v897, 0.0
        %v907 = vsel %vm905, %v896, 0.0
        %s908 = sld [smem:[#allocation6 + $0x7]]
        %v909 = vstv %s908
        %v910 = vmul.f32 %v909, %v674
        %v911 = vmul.f32 %v909, %v675
        %s912 = sld [smem:[#allocation6 + $0x8]]
        %v913 = vstv %s912
        %v914 = vmul.f32 %v913, %v691
        %v915 = vmul.f32 %v913, %v692
        %v916 = vadd.f32 %v910, %v914
        %v917 = vadd.f32 %v911, %v915
        %s918 = sld [smem:[#allocation6 + $0x9]]
        %v919 = vstv %s918
        %v920 = vmul.f32 %v919, %v708
        %v921 = vmul.f32 %v919, %v709
        %v922 = vadd.f32 %v916, %v920
        %v923 = vadd.f32 %v917, %v921
        %s924 = sld [smem:[#allocation6 + $0xa]]
        %v925 = vstv %s924
        %v926 = vmul.f32 %v925, %v653
        %v927 = vmul.f32 %v925, %v654
        %v928 = vadd.f32 %v922, %v926
        %v929 = vadd.f32 %v923, %v927
        %s930 = sld [smem:[#allocation6 + $0xb]]
        %v931 = vstv %s930
        %v932 = vmul.f32 %v931, %v725
        %v933 = vmul.f32 %v931, %v726
        %v934 = vadd.f32 %v928, %v932
        %v935 = vadd.f32 %v929, %v933
        %s936 = sld [smem:[#allocation6 + $0xc]]
        %v937 = vstv %s936
        %v938 = vmul.f32 %v937, %v742
        %v939 = vmul.f32 %v937, %v743
        %v940 = vadd.f32 %v934, %v938
        %v941 = vadd.f32 %v935, %v939
        %s942 = sld [smem:[#allocation6 + $0xd]]
        %v943 = vstv %s942
        %v944 = vmul.f32 %v943, %v759
        %v945 = vmul.f32 %v943, %v760
        %v946 = vadd.f32 %v940, %v944
        %v947 = vadd.f32 %v941, %v945
        %s948 = sld [smem:[#allocation6 + $0x38]]
        %v949 = vstv %s948
        %v950 = vmul.f32 %v949, %v767
        %v951 = vmul.f32 %v949, %v768
        %v952 = vadd.f32 %v946, %v950
        %v953 = vadd.f32 %v947, %v951
        %s954 = sld [smem:[#allocation6 + $0x39]]
        %v955 = vstv %s954
        %v956 = vmul.f32 %v955, %v775
        %v957 = vmul.f32 %v955, %v776
        %v958 = vadd.f32 %v952, %v956
        %v959 = vadd.f32 %v953, %v957
        %s960 = sld [smem:[#allocation6 + $0x3a]]
        %v961 = vstv %s960
        %v962 = vmul.f32 %v961, %v783
        %v963 = vmul.f32 %v961, %v784
        %v964 = vadd.f32 %v958, %v962
        %v965 = vadd.f32 %v959, %v963
        %s966 = sld [smem:[#allocation6 + $0x3b]]
        %v967 = vstv %s966
        %v968 = vmul.f32 %v967, %v657
        %v969 = vmul.f32 %v967, %v658
        %v970 = vadd.f32 %v964, %v968
        %v971 = vadd.f32 %v965, %v969
        %s972 = sld [smem:[#allocation6 + $0x3c]]
        %v973 = vstv %s972
        %v974 = vmul.f32 %v973, %v791
        %v975 = vmul.f32 %v973, %v792
        %v976 = vadd.f32 %v970, %v974
        %v977 = vadd.f32 %v971, %v975
        %s978 = sld [smem:[#allocation6 + $0x3d]]
        %v979 = vstv %s978
        %v980 = vmul.f32 %v979, %v799
        %v981 = vmul.f32 %v979, %v800
        %v982 = vadd.f32 %v976, %v980
        %v983 = vadd.f32 %v977, %v981
        %s984 = sld [smem:[#allocation6 + $0x3e]]
        %v985 = vstv %s984
        %v986 = vmul.f32 %v985, %v807
        %v987 = vmul.f32 %v985, %v808
        %v988 = vadd.f32 %v982, %v986
        %v989 = vadd.f32 %v983, %v987
        %990 = vrot.lane.b32.xlu0 %v988, 32
        %v991 = vpop.permute.xlu0 %990
        %992 = vrot.lane.b32.xlu0 %v989, 32
        %v993 = vpop.permute.xlu0 %992
        %vm994 = vcmp.lt.s32.totalorder %v327, 32
        %v995 = vsel %vm994, %v991, %v993
        %v996 = vsel %vm994, %v993, %v991
        %v997 = vadd.s32 %v327, 4294967264
        %v998 = vadd.s32 %v328, 4294967264
        %vm999 = vcmp.ge.s32.totalorder %v997, 0
        %vm1000 = vcmp.ge.s32.totalorder %v998, 0
        %vm1001 = vcmp.lt.s32.totalorder %v997, 256
        %vm1002 = vcmp.lt.s32.totalorder %v998, 256
        %vm1003 = vmand %vm999, %vm1001
        %vm1004 = vmand %vm1000, %vm1002
        %v1005 = vsel %vm1003, %v996, 0.0
        %v1006 = vsel %vm1004, %v995, 0.0
        %v1007 = vadd.f32 %v906, %v1005
        %v1008 = vadd.f32 %v907, %v1006
        %s1009 = sld [smem:[#allocation6 + $0xe]]
        %v1010 = vstv %s1009
        %v1011 = vmul.f32 %v1010, %v674
        %v1012 = vmul.f32 %v1010, %v675
        %s1013 = sld [smem:[#allocation6 + $0xf]]
        %v1014 = vstv %s1013
        %v1015 = vmul.f32 %v1014, %v691
        %v1016 = vmul.f32 %v1014, %v692
        %v1017 = vadd.f32 %v1011, %v1015
        %v1018 = vadd.f32 %v1012, %v1016
        %s1019 = sld [smem:[#allocation6 + $0x10]]
        %v1020 = vstv %s1019
        %v1021 = vmul.f32 %v1020, %v708
        %v1022 = vmul.f32 %v1020, %v709
        %v1023 = vadd.f32 %v1017, %v1021
        %v1024 = vadd.f32 %v1018, %v1022
        %s1025 = sld [smem:[#allocation6 + $0x11]]
        %v1026 = vstv %s1025
        %v1027 = vmul.f32 %v1026, %v653
        %v1028 = vmul.f32 %v1026, %v654
        %v1029 = vadd.f32 %v1023, %v1027
        %v1030 = vadd.f32 %v1024, %v1028
        %s1031 = sld [smem:[#allocation6 + $0x12]]
        %v1032 = vstv %s1031
        %v1033 = vmul.f32 %v1032, %v725
        %v1034 = vmul.f32 %v1032, %v726
        %v1035 = vadd.f32 %v1029, %v1033
        %v1036 = vadd.f32 %v1030, %v1034
        %s1037 = sld [smem:[#allocation6 + $0x13]]
        %v1038 = vstv %s1037
        %v1039 = vmul.f32 %v1038, %v742
        %v1040 = vmul.f32 %v1038, %v743
        %v1041 = vadd.f32 %v1035, %v1039
        %v1042 = vadd.f32 %v1036, %v1040
        %s1043 = sld [smem:[#allocation6 + $0x14]]
        %v1044 = vstv %s1043
        %v1045 = vmul.f32 %v1044, %v759
        %v1046 = vmul.f32 %v1044, %v760
        %v1047 = vadd.f32 %v1041, %v1045
        %v1048 = vadd.f32 %v1042, %v1046
        %s1049 = sld [smem:[#allocation6 + $0x3f]]
        %v1050 = vstv %s1049
        %v1051 = vmul.f32 %v1050, %v767
        %v1052 = vmul.f32 %v1050, %v768
        %v1053 = vadd.f32 %v1047, %v1051
        %v1054 = vadd.f32 %v1048, %v1052
        %s1055 = sld [smem:[#allocation6 + $0x40]]
        %v1056 = vstv %s1055
        %v1057 = vmul.f32 %v1056, %v775
        %v1058 = vmul.f32 %v1056, %v776
        %v1059 = vadd.f32 %v1053, %v1057
        %v1060 = vadd.f32 %v1054, %v1058
        %s1061 = sld [smem:[#allocation6 + $0x41]]
        %v1062 = vstv %s1061
        %v1063 = vmul.f32 %v1062, %v783
        %v1064 = vmul.f32 %v1062, %v784
        %v1065 = vadd.f32 %v1059, %v1063
        %v1066 = vadd.f32 %v1060, %v1064
        %s1067 = sld [smem:[#allocation6 + $0x42]]
        %v1068 = vstv %s1067
        %v1069 = vmul.f32 %v1068, %v657
        %v1070 = vmul.f32 %v1068, %v658
        %v1071 = vadd.f32 %v1065, %v1069
        %v1072 = vadd.f32 %v1066, %v1070
        %s1073 = sld [smem:[#allocation6 + $0x43]]
        %v1074 = vstv %s1073
        %v1075 = vmul.f32 %v1074, %v791
        %v1076 = vmul.f32 %v1074, %v792
        %v1077 = vadd.f32 %v1071, %v1075
        %v1078 = vadd.f32 %v1072, %v1076
        %s1079 = sld [smem:[#allocation6 + $0x44]]
        %v1080 = vstv %s1079
        %v1081 = vmul.f32 %v1080, %v799
        %v1082 = vmul.f32 %v1080, %v800
        %v1083 = vadd.f32 %v1077, %v1081
        %v1084 = vadd.f32 %v1078, %v1082
        %s1085 = sld [smem:[#allocation6 + $0x45]]
        %v1086 = vstv %s1085
        %v1087 = vmul.f32 %v1086, %v807
        %v1088 = vmul.f32 %v1086, %v808
        %v1089 = vadd.f32 %v1083, %v1087
        %v1090 = vadd.f32 %v1084, %v1088
        %1091 = vrot.lane.b32.xlu0 %v1089, 16
        %v1092 = vpop.permute.xlu0 %1091
        %1093 = vrot.lane.b32.xlu0 %v1090, 16
        %v1094 = vpop.permute.xlu0 %1093
        %vm1095 = vcmp.lt.s32.totalorder %v327, 16
        %v1096 = vsel %vm1095, %v1092, %v1094
        %v1097 = vsel %vm1095, %v1094, %v1092
        %v1098 = vadd.s32 %v328, 4294967280
        %vm1099 = vcmp.ge.s32.totalorder %v398, 0
        %vm1100 = vcmp.ge.s32.totalorder %v1098, 0
        %vm1101 = vcmp.lt.s32.totalorder %v398, 256
        %vm1102 = vcmp.lt.s32.totalorder %v1098, 256
        %vm1103 = vmand %vm1099, %vm1101
        %vm1104 = vmand %vm1100, %vm1102
        %v1105 = vsel %vm1103, %v1097, 0.0
        %v1106 = vsel %vm1104, %v1096, 0.0
        %v1107 = vadd.f32 %v1007, %v1105
        %v1108 = vadd.f32 %v1008, %v1106
        %s1109 = sld [smem:[#allocation6 + $0x15]]
        %v1110 = vstv %s1109
        %v1111 = vmul.f32 %v1110, %v674
        %v1112 = vmul.f32 %v1110, %v675
        %s1113 = sld [smem:[#allocation6 + $0x16]]
        %v1114 = vstv %s1113
        %v1115 = vmul.f32 %v1114, %v691
        %v1116 = vmul.f32 %v1114, %v692
        %v1117 = vadd.f32 %v1111, %v1115
        %v1118 = vadd.f32 %v1112, %v1116
        %s1119 = sld [smem:[#allocation6 + $0x17]]
        %v1120 = vstv %s1119
        %v1121 = vmul.f32 %v1120, %v708
        %v1122 = vmul.f32 %v1120, %v709
        %v1123 = vadd.f32 %v1117, %v1121
        %v1124 = vadd.f32 %v1118, %v1122
        %s1125 = sld [smem:[#allocation6 + $0x18]]
        %v1126 = vstv %s1125
        %v1127 = vmul.f32 %v1126, %v653
        %v1128 = vmul.f32 %v1126, %v654
        %v1129 = vadd.f32 %v1123, %v1127
        %v1130 = vadd.f32 %v1124, %v1128
        %s1131 = sld [smem:[#allocation6 + $0x19]]
        %v1132 = vstv %s1131
        %v1133 = vmul.f32 %v1132, %v725
        %v1134 = vmul.f32 %v1132, %v726
        %v1135 = vadd.f32 %v1129, %v1133
        %v1136 = vadd.f32 %v1130, %v1134
        %s1137 = sld [smem:[#allocation6 + $0x1a]]
        %v1138 = vstv %s1137
        %v1139 = vmul.f32 %v1138, %v742
        %v1140 = vmul.f32 %v1138, %v743
        %v1141 = vadd.f32 %v1135, %v1139
        %v1142 = vadd.f32 %v1136, %v1140
        %s1143 = sld [smem:[#allocation6 + $0x1b]]
        %v1144 = vstv %s1143
        %v1145 = vmul.f32 %v1144, %v759
        %v1146 = vmul.f32 %v1144, %v760
        %v1147 = vadd.f32 %v1141, %v1145
        %v1148 = vadd.f32 %v1142, %v1146
        %s1149 = sld [smem:[#allocation6 + $0x46]]
        %v1150 = vstv %s1149
        %v1151 = vmul.f32 %v1150, %v767
        %v1152 = vmul.f32 %v1150, %v768
        %v1153 = vadd.f32 %v1147, %v1151
        %v1154 = vadd.f32 %v1148, %v1152
        %s1155 = sld [smem:[#allocation6 + $0x47]]
        %v1156 = vstv %s1155
        %v1157 = vmul.f32 %v1156, %v775
        %v1158 = vmul.f32 %v1156, %v776
        %v1159 = vadd.f32 %v1153, %v1157
        %v1160 = vadd.f32 %v1154, %v1158
        %s1161 = sld [smem:[#allocation6 + $0x48]]
        %v1162 = vstv %s1161
        %v1163 = vmul.f32 %v1162, %v783
        %v1164 = vmul.f32 %v1162, %v784
        %v1165 = vadd.f32 %v1159, %v1163
        %v1166 = vadd.f32 %v1160, %v1164
        %s1167 = sld [smem:[#allocation6 + $0x49]]
        %v1168 = vstv %s1167
        %v1169 = vmul.f32 %v1168, %v657
        %v1170 = vmul.f32 %v1168, %v658
        %v1171 = vadd.f32 %v1165, %v1169
        %v1172 = vadd.f32 %v1166, %v1170
        %s1173 = sld [smem:[#allocation6 + $0x4a]]
        %v1174 = vstv %s1173
        %v1175 = vmul.f32 %v1174, %v791
        %v1176 = vmul.f32 %v1174, %v792
        %v1177 = vadd.f32 %v1171, %v1175
        %v1178 = vadd.f32 %v1172, %v1176
        %s1179 = sld [smem:[#allocation6 + $0x4b]]
        %v1180 = vstv %s1179
        %v1181 = vmul.f32 %v1180, %v799
        %v1182 = vmul.f32 %v1180, %v800
        %v1183 = vadd.f32 %v1177, %v1181
        %v1184 = vadd.f32 %v1178, %v1182
        %s1185 = sld [smem:[#allocation6 + $0x4c]]
        %v1186 = vstv %s1185
        %v1187 = vmul.f32 %v1186, %v807
        %v1188 = vmul.f32 %v1186, %v808
        %v1189 = vadd.f32 %v1183, %v1187
        %v1190 = vadd.f32 %v1184, %v1188
        %v1191 = vadd.f32 %v1107, %v1189
        %v1192 = vadd.f32 %v1108, %v1190
        %s1193 = sld [smem:[#allocation6 + $0x1c]]
        %v1194 = vstv %s1193
        %v1195 = vmul.f32 %v1194, %v674
        %v1196 = vmul.f32 %v1194, %v675
        %s1197 = sld [smem:[#allocation6 + $0x1d]]
        %v1198 = vstv %s1197
        %v1199 = vmul.f32 %v1198, %v691
        %v1200 = vmul.f32 %v1198, %v692
        %v1201 = vadd.f32 %v1195, %v1199
        %v1202 = vadd.f32 %v1196, %v1200
        %s1203 = sld [smem:[#allocation6 + $0x1e]]
        %v1204 = vstv %s1203
        %v1205 = vmul.f32 %v1204, %v708
        %v1206 = vmul.f32 %v1204, %v709
        %v1207 = vadd.f32 %v1201, %v1205
        %v1208 = vadd.f32 %v1202, %v1206
        %s1209 = sld [smem:[#allocation6 + $0x1f]]
        %v1210 = vstv %s1209
        %v1211 = vmul.f32 %v1210, %v653
        %v1212 = vmul.f32 %v1210, %v654
        %v1213 = vadd.f32 %v1207, %v1211
        %v1214 = vadd.f32 %v1208, %v1212
        %s1215 = sld [smem:[#allocation6 + $0x20]]
        %v1216 = vstv %s1215
        %v1217 = vmul.f32 %v1216, %v725
        %v1218 = vmul.f32 %v1216, %v726
        %v1219 = vadd.f32 %v1213, %v1217
        %v1220 = vadd.f32 %v1214, %v1218
        %s1221 = sld [smem:[#allocation6 + $0x21]]
        %v1222 = vstv %s1221
        %v1223 = vmul.f32 %v1222, %v742
        %v1224 = vmul.f32 %v1222, %v743
        %v1225 = vadd.f32 %v1219, %v1223
        %v1226 = vadd.f32 %v1220, %v1224
        %s1227 = sld [smem:[#allocation6 + $0x22]]
        %v1228 = vstv %s1227
        %v1229 = vmul.f32 %v1228, %v759
        %v1230 = vmul.f32 %v1228, %v760
        %v1231 = vadd.f32 %v1225, %v1229
        %v1232 = vadd.f32 %v1226, %v1230
        %s1233 = sld [smem:[#allocation6 + $0x4d]]
        %v1234 = vstv %s1233
        %v1235 = vmul.f32 %v1234, %v767
        %v1236 = vmul.f32 %v1234, %v768
        %v1237 = vadd.f32 %v1231, %v1235
        %v1238 = vadd.f32 %v1232, %v1236
        %s1239 = sld [smem:[#allocation6 + $0x4e]]
        %v1240 = vstv %s1239
        %v1241 = vmul.f32 %v1240, %v775
        %v1242 = vmul.f32 %v1240, %v776
        %v1243 = vadd.f32 %v1237, %v1241
        %v1244 = vadd.f32 %v1238, %v1242
        %s1245 = sld [smem:[#allocation6 + $0x4f]]
        %v1246 = vstv %s1245
        %v1247 = vmul.f32 %v1246, %v783
        %v1248 = vmul.f32 %v1246, %v784
        %v1249 = vadd.f32 %v1243, %v1247
        %v1250 = vadd.f32 %v1244, %v1248
        %s1251 = sld [smem:[#allocation6 + $0x50]]
        %v1252 = vstv %s1251
        %v1253 = vmul.f32 %v1252, %v657
        %v1254 = vmul.f32 %v1252, %v658
        %v1255 = vadd.f32 %v1249, %v1253
        %v1256 = vadd.f32 %v1250, %v1254
        %s1257 = sld [smem:[#allocation6 + $0x51]]
        %v1258 = vstv %s1257
        %v1259 = vmul.f32 %v1258, %v791
        %v1260 = vmul.f32 %v1258, %v792
        %v1261 = vadd.f32 %v1255, %v1259
        %v1262 = vadd.f32 %v1256, %v1260
        %s1263 = sld [smem:[#allocation6 + $0x52]]
        %v1264 = vstv %s1263
        %v1265 = vmul.f32 %v1264, %v799
        %v1266 = vmul.f32 %v1264, %v800
        %v1267 = vadd.f32 %v1261, %v1265
        %v1268 = vadd.f32 %v1262, %v1266
        %s1269 = sld [smem:[#allocation6 + $0x53]]
        %v1270 = vstv %s1269
        %v1271 = vmul.f32 %v1270, %v807
        %v1272 = vmul.f32 %v1270, %v808
        %v1273 = vadd.f32 %v1267, %v1271
        %v1274 = vadd.f32 %v1268, %v1272
        %1275 = vrot.lane.b32.xlu0 %v1273, 112
        %v1276 = vpop.permute.xlu0 %1275
        %1277 = vrot.lane.b32.xlu0 %v1274, 112
        %v1278 = vpop.permute.xlu0 %1277
        %vm1279 = vcmp.lt.s32.totalorder %v327, 112
        %v1280 = vsel %vm1279, %v1276, %v1278
        %v1281 = vsel %vm1279, %v1278, %v1276
        %v1282 = vadd.s32 %v327, 16
        %v1283 = vadd.s32 %v328, 16
        %vm1284 = vcmp.ge.s32.totalorder %v1282, 0
        %vm1285 = vcmp.ge.s32.totalorder %v1283, 0
        %vm1286 = vcmp.lt.s32.totalorder %v1282, 256
        %vm1287 = vcmp.lt.s32.totalorder %v1283, 256
        %vm1288 = vmand %vm1284, %vm1286
        %vm1289 = vmand %vm1285, %vm1287
        %v1290 = vsel %vm1288, %v1280, 0.0
        %v1291 = vsel %vm1289, %v1281, 0.0
        %v1292 = vadd.f32 %v1191, %v1290
        %v1293 = vadd.f32 %v1192, %v1291
        %s1294 = sld [smem:[#allocation6 + $0x23]]
        %v1295 = vstv %s1294
        %v1296 = vmul.f32 %v1295, %v674
        %v1297 = vmul.f32 %v1295, %v675
        %s1298 = sld [smem:[#allocation6 + $0x24]]
        %v1299 = vstv %s1298
        %v1300 = vmul.f32 %v1299, %v691
        %v1301 = vmul.f32 %v1299, %v692
        %v1302 = vadd.f32 %v1296, %v1300
        %v1303 = vadd.f32 %v1297, %v1301
        %s1304 = sld [smem:[#allocation6 + $0x25]]
        %v1305 = vstv %s1304
        %v1306 = vmul.f32 %v1305, %v708
        %v1307 = vmul.f32 %v1305, %v709
        %v1308 = vadd.f32 %v1302, %v1306
        %v1309 = vadd.f32 %v1303, %v1307
        %s1310 = sld [smem:[#allocation6 + $0x26]]
        %v1311 = vstv %s1310
        %v1312 = vmul.f32 %v1311, %v653
        %v1313 = vmul.f32 %v1311, %v654
        %v1314 = vadd.f32 %v1308, %v1312
        %v1315 = vadd.f32 %v1309, %v1313
        %s1316 = sld [smem:[#allocation6 + $0x27]]
        %v1317 = vstv %s1316
        %v1318 = vmul.f32 %v1317, %v725
        %v1319 = vmul.f32 %v1317, %v726
        %v1320 = vadd.f32 %v1314, %v1318
        %v1321 = vadd.f32 %v1315, %v1319
        %s1322 = sld [smem:[#allocation6 + $0x28]]
        %v1323 = vstv %s1322
        %v1324 = vmul.f32 %v1323, %v742
        %v1325 = vmul.f32 %v1323, %v743
        %v1326 = vadd.f32 %v1320, %v1324
        %v1327 = vadd.f32 %v1321, %v1325
        %s1328 = sld [smem:[#allocation6 + $0x29]]
        %v1329 = vstv %s1328
        %v1330 = vmul.f32 %v1329, %v759
        %v1331 = vmul.f32 %v1329, %v760
        %v1332 = vadd.f32 %v1326, %v1330
        %v1333 = vadd.f32 %v1327, %v1331
        %s1334 = sld [smem:[#allocation6 + $0x54]]
        %v1335 = vstv %s1334
        %v1336 = vmul.f32 %v1335, %v767
        %v1337 = vmul.f32 %v1335, %v768
        %v1338 = vadd.f32 %v1332, %v1336
        %v1339 = vadd.f32 %v1333, %v1337
        %s1340 = sld [smem:[#allocation6 + $0x55]]
        %v1341 = vstv %s1340
        %v1342 = vmul.f32 %v1341, %v775
        %v1343 = vmul.f32 %v1341, %v776
        %v1344 = vadd.f32 %v1338, %v1342
        %v1345 = vadd.f32 %v1339, %v1343
        %s1346 = sld [smem:[#allocation6 + $0x56]]
        %v1347 = vstv %s1346
        %v1348 = vmul.f32 %v1347, %v783
        %v1349 = vmul.f32 %v1347, %v784
        %v1350 = vadd.f32 %v1344, %v1348
        %v1351 = vadd.f32 %v1345, %v1349
        %s1352 = sld [smem:[#allocation6 + $0x57]]
        %v1353 = vstv %s1352
        %v1354 = vmul.f32 %v1353, %v657
        %v1355 = vmul.f32 %v1353, %v658
        %v1356 = vadd.f32 %v1350, %v1354
        %v1357 = vadd.f32 %v1351, %v1355
        %s1358 = sld [smem:[#allocation6 + $0x58]]
        %v1359 = vstv %s1358
        %v1360 = vmul.f32 %v1359, %v791
        %v1361 = vmul.f32 %v1359, %v792
        %v1362 = vadd.f32 %v1356, %v1360
        %v1363 = vadd.f32 %v1357, %v1361
        %s1364 = sld [smem:[#allocation6 + $0x59]]
        %v1365 = vstv %s1364
        %v1366 = vmul.f32 %v1365, %v799
        %v1367 = vmul.f32 %v1365, %v800
        %v1368 = vadd.f32 %v1362, %v1366
        %v1369 = vadd.f32 %v1363, %v1367
        %s1370 = sld [smem:[#allocation6 + $0x5a]]
        %v1371 = vstv %s1370
        %v1372 = vmul.f32 %v1371, %v807
        %v1373 = vmul.f32 %v1371, %v808
        %v1374 = vadd.f32 %v1368, %v1372
        %v1375 = vadd.f32 %v1369, %v1373
        %1376 = vrot.lane.b32.xlu0 %v1374, 96
        %v1377 = vpop.permute.xlu0 %1376
        %1378 = vrot.lane.b32.xlu0 %v1375, 96
        %v1379 = vpop.permute.xlu0 %1378
        %vm1380 = vcmp.lt.s32.totalorder %v327, 96
        %v1381 = vsel %vm1380, %v1377, %v1379
        %v1382 = vsel %vm1380, %v1379, %v1377
        %v1383 = vadd.s32 %v327, 32
        %v1384 = vadd.s32 %v328, 32
        %vm1385 = vcmp.ge.s32.totalorder %v1383, 0
        %vm1386 = vcmp.ge.s32.totalorder %v1384, 0
        %vm1387 = vcmp.lt.s32.totalorder %v1383, 256
        %vm1388 = vcmp.lt.s32.totalorder %v1384, 256
        %vm1389 = vmand %vm1385, %vm1387
        %vm1390 = vmand %vm1386, %vm1388
        %v1391 = vsel %vm1389, %v1381, 0.0
        %v1392 = vsel %vm1390, %v1382, 0.0
        %v1393 = vadd.f32 %v1292, %v1391
        %v1394 = vadd.f32 %v1293, %v1392
        %s1395 = sld [smem:[#allocation6 + $0x2a]]
        %v1396 = vstv %s1395
        %v1397 = vmul.f32 %v1396, %v674
        %v1398 = vmul.f32 %v1396, %v675
        %s1399 = sld [smem:[#allocation6 + $0x2b]]
        %v1400 = vstv %s1399
        %v1401 = vmul.f32 %v1400, %v691
        %v1402 = vmul.f32 %v1400, %v692
        %v1403 = vadd.f32 %v1397, %v1401
        %v1404 = vadd.f32 %v1398, %v1402
        %s1405 = sld [smem:[#allocation6 + $0x2c]]
        %v1406 = vstv %s1405
        %v1407 = vmul.f32 %v1406, %v708
        %v1408 = vmul.f32 %v1406, %v709
        %v1409 = vadd.f32 %v1403, %v1407
        %v1410 = vadd.f32 %v1404, %v1408
        %s1411 = sld [smem:[#allocation6 + $0x2d]]
        %v1412 = vstv %s1411
        %v1413 = vmul.f32 %v1412, %v653
        %v1414 = vmul.f32 %v1412, %v654
        %v1415 = vadd.f32 %v1409, %v1413
        %v1416 = vadd.f32 %v1410, %v1414
        %s1417 = sld [smem:[#allocation6 + $0x2e]]
        %v1418 = vstv %s1417
        %v1419 = vmul.f32 %v1418, %v725
        %v1420 = vmul.f32 %v1418, %v726
        %v1421 = vadd.f32 %v1415, %v1419
        %v1422 = vadd.f32 %v1416, %v1420
        %s1423 = sld [smem:[#allocation6 + $0x2f]]
        %v1424 = vstv %s1423
        %v1425 = vmul.f32 %v1424, %v742
        %v1426 = vmul.f32 %v1424, %v743
        %v1427 = vadd.f32 %v1421, %v1425
        %v1428 = vadd.f32 %v1422, %v1426
        %s1429 = sld [smem:[#allocation6 + $0x30]]
        %v1430 = vstv %s1429
        %v1431 = vmul.f32 %v1430, %v759
        %v1432 = vmul.f32 %v1430, %v760
        %v1433 = vadd.f32 %v1427, %v1431
        %v1434 = vadd.f32 %v1428, %v1432
        %s1435 = sld [smem:[#allocation6 + $0x5b]]
        %v1436 = vstv %s1435
        %v1437 = vmul.f32 %v1436, %v767
        %v1438 = vmul.f32 %v1436, %v768
        %v1439 = vadd.f32 %v1433, %v1437
        %v1440 = vadd.f32 %v1434, %v1438
        %s1441 = sld [smem:[#allocation6 + $0x5c]]
        %v1442 = vstv %s1441
        %v1443 = vmul.f32 %v1442, %v775
        %v1444 = vmul.f32 %v1442, %v776
        %v1445 = vadd.f32 %v1439, %v1443
        %v1446 = vadd.f32 %v1440, %v1444
        %s1447 = sld [smem:[#allocation6 + $0x5d]]
        %v1448 = vstv %s1447
        %v1449 = vmul.f32 %v1448, %v783
        %v1450 = vmul.f32 %v1448, %v784
        %v1451 = vadd.f32 %v1445, %v1449
        %v1452 = vadd.f32 %v1446, %v1450
        %s1453 = sld [smem:[#allocation6 + $0x5e]]
        %v1454 = vstv %s1453
        %v1455 = vmul.f32 %v1454, %v657
        %v1456 = vmul.f32 %v1454, %v658
        %v1457 = vadd.f32 %v1451, %v1455
        %v1458 = vadd.f32 %v1452, %v1456
        %s1459 = sld [smem:[#allocation6 + $0x5f]]
        %v1460 = vstv %s1459
        %v1461 = vmul.f32 %v1460, %v791
        %v1462 = vmul.f32 %v1460, %v792
        %v1463 = vadd.f32 %v1457, %v1461
        %v1464 = vadd.f32 %v1458, %v1462
        %s1465 = sld [smem:[#allocation6 + $0x60]]
        %v1466 = vstv %s1465
        %v1467 = vmul.f32 %v1466, %v799
        %v1468 = vmul.f32 %v1466, %v800
        %v1469 = vadd.f32 %v1463, %v1467
        %v1470 = vadd.f32 %v1464, %v1468
        %s1471 = sld [smem:[#allocation6 + $0x61]]
        %v1472 = vstv %s1471
        %v1473 = vmul.f32 %v1472, %v807
        %v1474 = vmul.f32 %v1472, %v808
        %v1475 = vadd.f32 %v1469, %v1473
        %v1476 = vadd.f32 %v1470, %v1474
        %1477 = vrot.lane.b32.xlu0 %v1475, 80
        %v1478 = vpop.permute.xlu0 %1477
        %1479 = vrot.lane.b32.xlu0 %v1476, 80
        %v1480 = vpop.permute.xlu0 %1479
        %vm1481 = vcmp.lt.s32.totalorder %v327, 80
        %v1482 = vsel %vm1481, %v1478, %v1480
        %v1483 = vsel %vm1481, %v1480, %v1478
        %v1484 = vadd.s32 %v327, 48
        %v1485 = vadd.s32 %v328, 48
        %vm1486 = vcmp.ge.s32.totalorder %v1484, 0
        %vm1487 = vcmp.ge.s32.totalorder %v1485, 0
        %vm1488 = vcmp.lt.s32.totalorder %v1484, 256
        %vm1489 = vcmp.lt.s32.totalorder %v1485, 256
        %vm1490 = vmand %vm1486, %vm1488
        %vm1491 = vmand %vm1487, %vm1489
        %v1492 = vsel %vm1490, %v1482, 0.0
        %v1493 = vsel %vm1491, %v1483, 0.0
        %v1494 = vadd.f32 %v1393, %v1492
        %v1495 = vadd.f32 %v1394, %v1493
        %s1496 = sld [smem:[#allocation7]]
        %v1497 = vstv %s1496
        %v1498 = vmul.f32 %v1494, %v1497
        %v1499 = vmul.f32 %v1495, %v1497
        %s1500 = sld [smem:[#allocation7 + $0x1]]
        %v1501 = vstv %s1500
        %v1502 = vadd.f32 %v1498, %v1501
        %v1503 = vadd.f32 %v1499, %v1501
        %v1504 = vxor.u32 %v1502, 2147483648
        %v1505 = vxor.u32 %v1503, 2147483648
        %v1506 = vmul.f32 %v1504, 1.442695
        %v1507 = vpow.pop %v1506
        %v1508 = vmul.f32 %v1505, 1.442695
        %v1509 = vpow.pop %v1508
        %v1510 = vadd.f32 %v1507, 1.0
        %v1511 = vadd.f32 %v1509, 1.0
        %v1512 = vrcp.pop %v1510
        %v1513 = vmul.f32 %v1510, %v1512
        %v1514 = vsub.f32 1.0, %v1513
        %v1515 = vmul.f32 %v1512, %v1514
        %v1516 = vadd.f32 %v1512, %v1515
        %vm1517 = vweird.f32 %v1510
        %vm1518 = vweird.f32 %v1512
        %vm1519 = vmor %vm1517, %vm1518
        %v1520 = vsel %vm1519, %v1512, %v1516
        %v1521 = vand.u32 2147483647, %v1510
        %vm1522 = vcmp.eq.f32.partialorder %v1521, 8.507059e+37
        %v1523 = vand.u32 %v1510, 2147483648
        %v1524 = vor.u32 1.1754944e-38, %v1523
        %v1525 = vsel %vm1522, %v1524, %v1520
        %v1526 = vmul.f32 1.0, %v1525
        %v1527 = vrcp.pop %v1511
        %v1528 = vmul.f32 %v1511, %v1527
        %v1529 = vsub.f32 1.0, %v1528
        %v1530 = vmul.f32 %v1527, %v1529
        %v1531 = vadd.f32 %v1527, %v1530
        %vm1532 = vweird.f32 %v1511
        %vm1533 = vweird.f32 %v1527
        %vm1534 = vmor %vm1532, %vm1533
        %v1535 = vsel %vm1534, %v1527, %v1531
        %v1536 = vand.u32 2147483647, %v1511
        %vm1537 = vcmp.eq.f32.partialorder %v1536, 8.507059e+37
        %v1538 = vand.u32 %v1511, 2147483648
        %v1539 = vor.u32 1.1754944e-38, %v1538
        %v1540 = vsel %vm1537, %v1539, %v1535
        %v1541 = vmul.f32 1.0, %v1540
        %v1542 = vmul.f32 %v353, %v518
        %v1543 = vmul.f32 %v354, %v518
        %v1544 = vmul.f32 %v355, %v552
        %v1545 = vmul.f32 %v356, %v552
        %v1546 = vmul.f32 %v357, %v590
        %v1547 = vmul.f32 %v358, %v590
        %v1548 = vperm.slane %v1526, 0
        %v1549 = vperm.slane %v1541, 0
        %v1550 = vmul.f32 %v1542, %v1548
        %v1551 = vmul.f32 %v1543, %v1549
        %v1552 = vmul.f32 %v1544, %v1548
        %v1553 = vmul.f32 %v1545, %v1549
        %v1554 = vmul.f32 %v1546, %v1548
        %v1555 = vmul.f32 %v1547, %v1549
        %v1556 = vmul.f32 %v627, %v1548
        %v1557 = vmul.f32 %v628, %v1549
        %1558 = vst [vmem:[%s325] sm:$0xff] %v1550
        %1559 = vst [vmem:[%s325 + $0x8] sm:$0xff] %v1551
        %1560 = vst [vmem:[%s325 + $0x10] sm:$0xff] %v1552
        %1561 = vst [vmem:[%s325 + $0x18] sm:$0xff] %v1553
        %1562 = vst [vmem:[%s325 + $0x20] sm:$0xff] %v1554
        %1563 = vst [vmem:[%s325 + $0x28] sm:$0xff] %v1555
        %1564 = vst [vmem:[%s325 + $0x30] sm:$0xff] %v1556
        %1565 = vst [vmem:[%s325 + $0x38] sm:$0xff] %v1557
        %s1566 = sand.u32 %s186, 1
        %s1567 = scalar_lea.sflag [#allocation4], %s1566
        %s1568 = sand.u32 %s186, 1
        %s1569 = smul.addr %s1568, 64
        %s1570 = scalar_lea.vmem [#allocation9], %s1569
        // Predicated region
        $region61: #{tpu_custom_call.1} parent=47 // pred_check
          %p1571 = pneg %p196
        $region62: #{tpu_custom_call.1} parent=47 // pred_check_branch
          %1573 = sbr.rel (%p1571) target = $region64
        $region63: #{tpu_custom_call.1} parent=47 // pred_region
          %1575 = vsyncadd %s1567, 0
          %s1576 = smul.addr %s26, 8
          %s1577 = smul.addr %s1576, 8
          %s1578 = scalar_lea.hbm %s7, %s1577
          %s1579 = sshll.u32 %s1570, 4
          %s1580 = int_to_ptr.vmem [resolvable:$true] %s1579
          %s1581 = sshll.u32 %s1578, 4
          %s1582 = int_to_ptr.hbm [resolvable:$true] %s1581
          %1587 = dma.vmem_to_hbm [thread:$0]  %s1580, 1024, %s1582, %s1567, 256, 256, 16
        $region64: #{tpu_custom_call.1} parent=47 // pred_fallthru
          _
      $region48: #{tpu_custom_call.1} parent=5 // pred_fallthru
        _
      %p1588 = scmp.le.s32.totalorder 2, %s21
      // Predicated region
      $region65: #{tpu_custom_call.1} parent=5 // pred_check
        %p1589 = pneg %p1588
      $region66: #{tpu_custom_call.1} parent=5 // pred_check_branch
        %1591 = sbr.rel (%p1589) target = $region68
      $region67: #{tpu_custom_call.1} parent=5 // pred_region
        %s1592 = ssub.s32 %s21, 2
        // Predicated region
        $region69: #{tpu_custom_call.1} parent=67 // pred_check
          %p1593 = pneg %p202
        $region70: #{tpu_custom_call.1} parent=67 // pred_check_branch
          %1595 = sbr.rel (%p1593) target = $region72
        $region71: #{tpu_custom_call.1} parent=67 // pred_region
          %s1596 = sand.u32 %s187, 1
          %s1597 = scalar_lea.sflag [#allocation4], %s1596
          %s1598 = sand.u32 %s187, 1
          %s1599 = smul.addr %s1598, 64
          %s1600 = scalar_lea.vmem [#allocation9], %s1599
          %1602 = dma.done %s1597, 1024
        $region72: #{tpu_custom_call.1} parent=67 // pred_fallthru
          _
      $region68: #{tpu_custom_call.1} parent=5 // pred_fallthru
        _
    $region6: #{tpu_custom_call.1} parent=1 // loop_footer
      %s25 = sadd.s32 1, %s21
    $region7: #{tpu_custom_call.1} parent=1 // loop_footer_branch
      %20 = sbr.rel target = $region3
    $region8: #{tpu_custom_call.1} parent=1 // loop_exit
      _
    %1603 = vsyncpa [#allocation3], 1
    %s1604 = scalar_lea.sflag [#allocation3], 1
    %1605 = vsyncpa %s1604, 1
    %1606 = vsyncpa [#allocation4], 1
    %s1607 = scalar_lea.sflag [#allocation4], 1
    %1608 = vsyncpa %s1607, 1
    %1609 = vsyncpa [#allocation5], 1
    %s1610 = scalar_lea.sflag [#allocation5], 1
    %1611 = vsyncpa %s1610, 1
    %1612 = vsyncpa [#allocation8], 1

</llo_original>
